<compile_context>
chip_gen: v7x
topology: tpu7x:2x2x1
jax: 0.10.0
libtpu: 0.0.40
codegen_flags: <defaults>
</compile_context>

<pallas_src>
import math
from functools import partial

import numpy as np
import jax
import jax.numpy as jnp
from jax.experimental import pallas as pl
from jax.experimental.pallas import tpu as pltpu


# ----------------------------------------------------------------------------- helpers
def _gelu_tanh(v):
    c0 = 0.7978845608028654  # sqrt(2/pi)
    return 0.5 * v * (1.0 + jnp.tanh(c0 * (v + 0.044715 * (v * v * v))))


def _conv1_matrix(w, T, C, Lp):
    """Band matrix for Conv2d(1, C, (1,15), stride=(1,8), pad=(0,7)) along T.

    The zero padding is folded into the band (clipped at the edges) so the kernel
    reads the UNPADDED input.  w: (C, 15).  Returns (T, Lp) with
    A[8t + k - 7, t*C + c] = w[c, k] whenever the row index is in [0, T).
    """
    T1 = (T - 1) // 8 + 1
    A = np.zeros((T, Lp), np.float32)
    for t in range(T1):
        for k in range(15):
            i = 8 * t + k - 7
            if 0 <= i < T:
                for c in range(C):
                    A[i, t * C + c] = w[c, k]
    return A


def _conv3_matrix(w, T1, C, Lp):
    """Band matrix for Conv2d(C, C, (1,3), pad=(0,1)) in the (t*C + c) lane layout.

    w: (C_out, C_in, 3).  A[(t+dk-1)*C + ci, t*C + co] = w[co, ci, dk].
    """
    A = np.zeros((Lp, Lp), np.float32)
    for t in range(T1):
        for dk in range(3):
            ts = t + dk - 1
            if ts < 0 or ts >= T1:
                continue
            for co in range(C):
                for ci in range(C):
                    A[ts * C + ci, t * C + co] = w[co, ci, dk]
    return A


def _vmem_capacity_bytes():
    try:
        cap = getattr(pltpu.get_tpu_info(), "vmem_capacity_bytes", None)
        if cap:
            return int(cap)
    except Exception:
        pass
    return 64 * 1024 * 1024  # conservative fallback (v7x per-TensorCore VMEM)


def _auto_block_b(B, NA, T, Lp, mat_itemsize):
    """Samples per grid step, sized from the running chip's VMEM."""
    cap = _vmem_capacity_bytes()
    # Constants (double-buffered by the pipeline): A1 + A2 + A3 + small f32 vectors.
    const_bytes = 2 * (mat_itemsize * (T * Lp + 2 * Lp * Lp) + 4 * (6 + 12 + 4) * Lp)
    # Per-sample working set: x block + out block (double-buffered) plus ~6 live
    # f32 (NA, Lp) intermediates inside the kernel body.
    per_sample = 4 * NA * (2 * T + 8 * Lp)
    budget = max(int(cap * 0.25) - const_bytes, per_sample)
    bb = max(1, budget // per_sample)
    if B >= 2:
        bb = min(bb, (B + 1) // 2)  # keep >= 2 grid steps (v7x megacore, pipelining)
    return int(min(bb, B))


# ----------------------------------------------------------------------------- kernel
def _temporal_conv_kernel(x_ref, a1_ref, a2_ref, a3_ref, vec_ref, g_ref, gtg_ref,
                          o_ref, *, block_b, NA, eps=1e-5):
    # x_ref  : (R, T)      R = block_b * NA rows (block_b samples, NA electrodes each)
    # a1_ref : (T, Lp)     conv1 band (stride-8, zero padding folded in), matmul dtype
    # a2/a3  : (Lp, Lp)    conv2 / conv3 band matrices, matmul dtype
    # vec_ref: (6, Lp)     rows 0-2 conv biases, rows 3-5 GroupNorm betas (per lane)
    # g_ref  : (Lp, 4)     lane -> group selector pre-scaled by 1/(NA*T1*C/4)
    # gtg_ref: (3, 4, Lp)  per-stage group -> lane broadcast with GroupNorm gamma folded
    vecs = vec_ref[...]
    G = g_ref[...]

    def mm_conv(a, b_ref):          # MXU: cast LHS to the band-matrix dtype, f32 acc
        return jnp.dot(a.astype(b_ref.dtype), b_ref[...],
                       preferred_element_type=jnp.float32)

    def mm32(a, b):                 # tiny f32 matmuls for the GroupNorm stats paths
        return jnp.dot(a, b, preferred_element_type=jnp.float32)

    def stage(h2d, a_ref, idx):
        # Banded convolution + bias, directly in the (t*C + c) lane layout.
        y = mm_conv(h2d, a_ref) + vecs[idx][None, :]                  # (R, Lp) f32
        # GroupNorm(4, C): per-sample stats.  Sublane (XLU) reduce over the NA rows of
        # each sample, then lane->group reduce / group->lane broadcast via tiny matmuls.
        # (NA is a multiple of 8 here so the reshape is a free sublane split.)
        y3 = y.reshape(block_b, NA, y.shape[-1])
        s1 = jnp.sum(y3, axis=1)                                      # (block_b, Lp)
        s2 = jnp.sum(y3 * y3, axis=1)
        mean_g = mm32(s1, G)                                          # (block_b, 4), 1/count folded into G
        msq_g = mm32(s2, G)
        istd_g = jax.lax.rsqrt(msq_g - mean_g * mean_g + eps)
        gtg = gtg_ref[idx]                                            # (4, Lp), gamma folded in
        scale = mm32(istd_g, gtg)                                     # istd*gamma  per (sample, lane)
        shift = mm32(mean_g * istd_g, gtg)                            # mean*istd*gamma
        yn = (y3 * scale[:, None, :] - shift[:, None, :]).reshape(block_b * NA, y.shape[-1])
        return _gelu_tanh(yn + vecs[3 + idx][None, :])

    h = stage(x_ref[...], a1_ref, 0)
    h = stage(h, a2_ref, 1)
    h = stage(h, a3_ref, 2)
    o_ref[...] = h.astype(o_ref.dtype)        # already 'NA x (T C)' — lane-dense store


# ----------------------------------------------------------------------------- wrapper
def temporal_conv(x, params, block_b=None, matmul_dtype=jnp.bfloat16):
    """x: (B, N, A, T) float32.  Returns (B, N*A, T1*C) with T1 = (T-1)//8 + 1."""
    (w1, b1, g1, be1, w2, b2, g2, be2, w3, b3, g3, be3) = params
    B, N, A, T = x.shape
    NA = N * A
    C = int(w1.shape[0])
    n_groups = 4
    cg = C // n_groups
    T1 = (T - 1) // 8 + 1
    L = T1 * C
    Lp = ((L + 127) // 128) * 128   # lane-dense width (multiple of 128); sliced at end

    # Trace-time constants built on host from the (small) conv / norm parameters.
    A1 = jnp.asarray(_conv1_matrix(np.asarray(w1)[:, 0, 0, :], T, C, Lp), matmul_dtype)
    A2 = jnp.asarray(_conv3_matrix(np.asarray(w2)[:, :, 0, :], T1, C, Lp), matmul_dtype)
    A3 = jnp.asarray(_conv3_matrix(np.asarray(w3)[:, :, 0, :], T1, C, Lp), matmul_dtype)

    def lane(v):                    # per-channel (C,) -> per-lane (Lp,), lane = t*C + c
        o = np.zeros((Lp,), np.float32)
        o[:L] = np.tile(np.asarray(v, np.float32), T1)
        return o

    vecs = jnp.asarray(np.stack([lane(b1), lane(b2), lane(b3),
                                 lane(be1), lane(be2), lane(be3)], axis=0))

    inv_count = 1.0 / float(NA * T1 * cg)     # 1 / elements per (sample, group)
    Gm = np.zeros((Lp, n_groups), np.float32)
    for t in range(T1):
        for c in range(C):
            Gm[t * C + c, c // cg] = inv_count
    Gm = jnp.asarray(Gm)

    def gt_gamma(gamma):            # group -> lane broadcast with gamma folded in
        gt = np.zeros((n_groups, Lp), np.float32)
        gn = np.asarray(gamma, np.float32)
        for t in range(T1):
            for c in range(C):
                gt[c // cg, t * C + c] = gn[c]
        return gt

    GTg = jnp.asarray(np.stack([gt_gamma(g1), gt_gamma(g2), gt_gamma(g3)], axis=0))

    # --- VMEM-aware batching of samples per grid step --------------------------------
    if block_b is None:
        block_b = _auto_block_b(B, NA, T, Lp, jnp.dtype(matmul_dtype).itemsize)
    block_b = int(max(1, min(block_b, B)))
    step = 8 // math.gcd(NA, 8)                 # make (block_b * NA) % 8 == 0
    block_b = max(step, (block_b // step) * step)
    Bp = ((B + block_b - 1) // block_b) * block_b
    R = block_b * NA

    # No temporal padding (folded into A1): the reshape below is a free bitcast; only
    # whole padded samples are appended when Bp > B (their rows are sliced off again).
    xf = x.reshape(B * NA, T).astype(jnp.float32)
    if Bp != B:
        xf = jnp.pad(xf, ((0, (Bp - B) * NA), (0, 0)))

    # Constant inputs use a constant index_map so they are DMA'd once and not re-fetched
    # (they are still double-buffered; negligible here — Buffered(1) if VMEM ever tight).
    out = pl.pallas_call(
        partial(_temporal_conv_kernel, block_b=block_b, NA=NA),
        out_shape=jax.ShapeDtypeStruct((Bp * NA, Lp), jnp.float32),
        grid_spec=pltpu.PrefetchScalarGridSpec(
            num_scalar_prefetch=0,
            grid=(Bp // block_b,),
            in_specs=[
                pl.BlockSpec((R, T), lambda i: (i, 0)),               # x rows (block_b samples)
                pl.BlockSpec((T, Lp), lambda i: (0, 0)),              # conv1 band
                pl.BlockSpec((Lp, Lp), lambda i: (0, 0)),             # conv2 band
                pl.BlockSpec((Lp, Lp), lambda i: (0, 0)),             # conv3 band
                pl.BlockSpec((6, Lp), lambda i: (0, 0)),              # biases / betas
                pl.BlockSpec((Lp, n_groups), lambda i: (0, 0)),       # lane -> group (scaled)
                pl.BlockSpec((3, n_groups, Lp), lambda i: (0, 0, 0)),  # group -> lane * gamma
            ],
            out_specs=pl.BlockSpec((R, Lp), lambda i: (i, 0)),
        ),
        compiler_params=pltpu.CompilerParams(
            dimension_semantics=("parallel",),                        # megacore sharding (v7x)
            vmem_limit_bytes=min((_vmem_capacity_bytes() * 3) // 4, 128 * 1024 * 1024),
        ),
    )(xf, A1, A2, A3, vecs, Gm, GTg)

    return out[:B * NA, :L].reshape(B, NA, L)


# ----------------------------------------------------------------------------- reference
def _reference(x, params):
    (w1, b1, g1, be1, w2, b2, g2, be2, w3, b3, g3, be3) = params
    B, N, A, T = x.shape
    h = x.reshape(B, N * A, T)[:, None, :, :]

    def conv(h, w, b, stride, pad):
        y = jax.lax.conv_general_dilated(
            h, w, window_strides=(1, stride), padding=((0, 0), (pad, pad)),
            dimension_numbers=("NCHW", "OIHW", "NCHW"),
            precision=jax.lax.Precision.HIGHEST)
        return y + b[None, :, None, None]

    def gn(h, gamma, beta, groups=4, eps=1e-5):
        Bh, Ch, Hh, Wh = h.shape
        hg = h.reshape(Bh, groups, Ch // groups, Hh, Wh)
        mu = hg.mean(axis=(2, 3, 4), keepdims=True)
        var = hg.var(axis=(2, 3, 4), keepdims=True)
        hn = ((hg - mu) / jnp.sqrt(var + eps)).reshape(Bh, Ch, Hh, Wh)
        return hn * gamma[None, :, None, None] + beta[None, :, None, None]

    h = _gelu_tanh(gn(conv(h, w1, b1, 8, 7), g1, be1))
    h = _gelu_tanh(gn(conv(h, w2, b2, 1, 1), g2, be2))
    h = _gelu_tanh(gn(conv(h, w3, b3, 1, 1), g3, be3))
    Bh, Ch, NAh, T1h = h.shape
    return jnp.transpose(h, (0, 2, 3, 1)).reshape(Bh, NAh, T1h * Ch)   # 'B C NA T -> B NA (T C)'


# ----------------------------------------------------------------------------- test
if __name__ == "__main__":
    key = jax.random.PRNGKey(0)
    keys = jax.random.split(key, 13)

    B, N, A, T = 2, 2, 4, 64      # NA = 8 electrodes, T = 64 time samples
    C = 8                          # out_chans
    T1 = (T - 1) // 8 + 1          # = 8

    def u(k, shape, fan_in):
        bnd = 1.0 / (fan_in ** 0.5)
        return jax.random.uniform(k, shape, jnp.float32, -bnd, bnd)

    w1 = u(keys[0], (C, 1, 1, 15), 15)
    b1 = u(keys[1], (C,), 15)
    w2 = u(keys[2], (C, C, 1, 3), C * 3)
    b2 = u(keys[3], (C,), C * 3)
    w3 = u(keys[4], (C, C, 1, 3), C * 3)
    b3 = u(keys[5], (C,), C * 3)
    g1 = 1.0 + 0.1 * jax.random.normal(keys[6], (C,), jnp.float32)
    be1 = 0.1 * jax.random.normal(keys[7], (C,), jnp.float32)
    g2 = 1.0 + 0.1 * jax.random.normal(keys[8], (C,), jnp.float32)
    be2 = 0.1 * jax.random.normal(keys[9], (C,), jnp.float32)
    g3 = 1.0 + 0.1 * jax.random.normal(keys[10], (C,), jnp.float32)
    be3 = 0.1 * jax.random.normal(keys[11], (C,), jnp.float32)
    x = jax.random.normal(keys[12], (B, N, A, T), jnp.float32)

    params = (w1, b1, g1, be1, w2, b2, g2, be2, w3, b3, g3, be3)
    ref = _reference(x, params)

    # Tight check with f32 matmuls (validates kernel structure / layout exactly).
    out_f32 = temporal_conv(x, params, matmul_dtype=jnp.float32)
    jax.block_until_ready(out_f32)
    assert out_f32.shape == (B, N * A, T1 * C), out_f32.shape
    assert jnp.allclose(out_f32, ref, atol=3e-3, rtol=3e-3), \
        float(jnp.max(jnp.abs(out_f32 - ref)))

    # Default fast path: bf16 MXU inputs, f32 accumulation (looser tolerance).
    out = temporal_conv(x, params)
    jax.block_until_ready(out)
    assert out.shape == (B, N * A, T1 * C), out.shape
    assert jnp.allclose(out, ref, atol=5e-2, rtol=5e-2), \
        float(jnp.max(jnp.abs(out - ref)))

    print("KERNEL_OK")
</pallas_src>

<mosaic_0001>
module attributes {stable_mosaic.version = 11 : i64} {
  func.func @_temporal_conv_kernel(%arg0: i32, %arg1: memref<8x64xf32, #tpu.memory_space<vmem>>, %arg2: memref<64x128xf32, #tpu.memory_space<vmem>>, %arg3: memref<128x128xf32, #tpu.memory_space<vmem>>, %arg4: memref<128x128xf32, #tpu.memory_space<vmem>>, %arg5: memref<6x128xf32, #tpu.memory_space<vmem>>, %arg6: memref<128x4xf32, #tpu.memory_space<vmem>>, %arg7: memref<3x4x128xf32, #tpu.memory_space<vmem>>, %arg8: memref<8x128xf32, #tpu.memory_space<vmem>>) attributes {dimension_semantics = [#tpu.dimension_semantics<parallel>], iteration_bounds = array<i64: 2>, scalar_prefetch = 0 : i64, scratch_operands = 0 : i64, tpu.core_type = #tpu.core_type<tc>, window_params = [{transform_indices = @transform_0, window_bounds = array<i64: 8, 64>}, {pipeline_mode = #tpu.pipeline_mode<synchronous>, transform_indices = @transform_1, window_bounds = array<i64: 64, 128>}, {pipeline_mode = #tpu.pipeline_mode<synchronous>, transform_indices = @transform_2, window_bounds = array<i64: 128, 128>}, {pipeline_mode = #tpu.pipeline_mode<synchronous>, transform_indices = @transform_3, window_bounds = array<i64: 128, 128>}, {pipeline_mode = #tpu.pipeline_mode<synchronous>, transform_indices = @transform_4, window_bounds = array<i64: 6, 128>}, {pipeline_mode = #tpu.pipeline_mode<synchronous>, transform_indices = @transform_5, window_bounds = array<i64: 128, 4>}, {pipeline_mode = #tpu.pipeline_mode<synchronous>, transform_indices = @transform_6, window_bounds = array<i64: 3, 4, 128>}, {transform_indices = @transform_7, window_bounds = array<i64: 8, 128>}]} {
    %c0 = arith.constant 0 : index
    %c0_0 = arith.constant 0 : index
    %0 = vector.load %arg5[%c0, %c0_0] : memref<6x128xf32, #tpu.memory_space<vmem>>, vector<6x128xf32>
    %c0_1 = arith.constant 0 : index
    %c0_2 = arith.constant 0 : index
    %1 = vector.load %arg6[%c0_1, %c0_2] : memref<128x4xf32, #tpu.memory_space<vmem>>, vector<128x4xf32>
    %c0_3 = arith.constant 0 : index
    %c0_4 = arith.constant 0 : index
    %2 = vector.load %arg1[%c0_3, %c0_4] : memref<8x64xf32, #tpu.memory_space<vmem>>, vector<8x64xf32>
    %c0_5 = arith.constant 0 : index
    %c0_6 = arith.constant 0 : index
    %3 = vector.load %arg2[%c0_5, %c0_6] : memref<64x128xf32, #tpu.memory_space<vmem>>, vector<64x128xf32>
    %cst = arith.constant dense<0.000000e+00> : vector<8x128xf32>
    %4 = tpu.matmul %2, %3, %cst {dimension_numbers = #tpu.dot_dimension_numbers<[1], [0], [0], [1], [0, 0, 1, 1], [], []>} : vector<8x64xf32>, vector<64x128xf32>, vector<8x128xf32> -> vector<8x128xf32>
    %5 = vector.extract_strided_slice %0 {offsets = [0, 0], sizes = [1, 128], strides = [1, 1]} : vector<6x128xf32> to vector<1x128xf32>
    %6 = vector.shape_cast %5 : vector<1x128xf32> to vector<128xf32>
    %7 = vector.shape_cast %6 : vector<128xf32> to vector<1x128xf32>
    %8 = vector.broadcast %7 : vector<1x128xf32> to vector<8x128xf32>
    %9 = arith.addf %4, %8 : vector<8x128xf32>
    %10 = vector.shape_cast %9 : vector<8x128xf32> to vector<1x8x128xf32>
    %cst_7 = arith.constant dense<0.000000e+00> : vector<1x128xf32>
    %11 = vector.multi_reduction <add>, %10, %cst_7 [1] : vector<1x8x128xf32> to vector<1x128xf32>
    %12 = arith.mulf %10, %10 : vector<1x8x128xf32>
    %cst_8 = arith.constant dense<0.000000e+00> : vector<1x128xf32>
    %13 = vector.multi_reduction <add>, %12, %cst_8 [1] : vector<1x8x128xf32> to vector<1x128xf32>
    %cst_9 = arith.constant dense<0.000000e+00> : vector<1x4xf32>
    %14 = tpu.matmul %11, %1, %cst_9 {dimension_numbers = #tpu.dot_dimension_numbers<[1], [0], [0], [1], [0, 0, 1, 1], [], []>} : vector<1x128xf32>, vector<128x4xf32>, vector<1x4xf32> -> vector<1x4xf32>
    %cst_10 = arith.constant dense<0.000000e+00> : vector<1x4xf32>
    %15 = tpu.matmul %13, %1, %cst_10 {dimension_numbers = #tpu.dot_dimension_numbers<[1], [0], [0], [1], [0, 0, 1, 1], [], []>} : vector<1x128xf32>, vector<128x4xf32>, vector<1x4xf32> -> vector<1x4xf32>
    %16 = arith.mulf %14, %14 : vector<1x4xf32>
    %17 = arith.subf %15, %16 : vector<1x4xf32>
    %cst_11 = arith.constant 9.99999974E-6 : f32
    %18 = vector.broadcast %cst_11 : f32 to vector<1x4xf32>
    %19 = arith.addf %17, %18 : vector<1x4xf32>
    %20 = math.rsqrt %19 : vector<1x4xf32>
    %c0_12 = arith.constant 0 : index
    %c0_13 = arith.constant 0 : index
    %c0_14 = arith.constant 0 : index
    %21 = vector.load %arg7[%c0_12, %c0_13, %c0_14] : memref<3x4x128xf32, #tpu.memory_space<vmem>>, vector<1x4x128xf32>
    %22 = vector.shape_cast %21 : vector<1x4x128xf32> to vector<4x128xf32>
    %cst_15 = arith.constant dense<0.000000e+00> : vector<1x128xf32>
    %23 = tpu.matmul %20, %22, %cst_15 {dimension_numbers = #tpu.dot_dimension_numbers<[1], [0], [0], [1], [0, 0, 1, 1], [], []>} : vector<1x4xf32>, vector<4x128xf32>, vector<1x128xf32> -> vector<1x128xf32>
    %24 = arith.mulf %14, %20 : vector<1x4xf32>
    %cst_16 = arith.constant dense<0.000000e+00> : vector<1x128xf32>
    %25 = tpu.matmul %24, %22, %cst_16 {dimension_numbers = #tpu.dot_dimension_numbers<[1], [0], [0], [1], [0, 0, 1, 1], [], []>} : vector<1x4xf32>, vector<4x128xf32>, vector<1x128xf32> -> vector<1x128xf32>
    %26 = vector.shape_cast %23 : vector<1x128xf32> to vector<1x1x128xf32>
    %27 = vector.broadcast %26 : vector<1x1x128xf32> to vector<1x8x128xf32>
    %28 = arith.mulf %10, %27 : vector<1x8x128xf32>
    %29 = vector.shape_cast %25 : vector<1x128xf32> to vector<1x1x128xf32>
    %30 = vector.broadcast %29 : vector<1x1x128xf32> to vector<1x8x128xf32>
    %31 = arith.subf %28, %30 : vector<1x8x128xf32>
    %32 = vector.shape_cast %31 : vector<1x8x128xf32> to vector<8x128xf32>
    %33 = vector.extract_strided_slice %0 {offsets = [3, 0], sizes = [1, 128], strides = [1, 1]} : vector<6x128xf32> to vector<1x128xf32>
    %34 = vector.shape_cast %33 : vector<1x128xf32> to vector<128xf32>
    %35 = vector.shape_cast %34 : vector<128xf32> to vector<1x128xf32>
    %36 = vector.broadcast %35 : vector<1x128xf32> to vector<8x128xf32>
    %37 = arith.addf %32, %36 : vector<8x128xf32>
    %cst_17 = arith.constant 5.000000e-01 : f32
    %38 = vector.broadcast %cst_17 : f32 to vector<8x128xf32>
    %39 = arith.mulf %38, %37 : vector<8x128xf32>
    %40 = arith.mulf %37, %37 : vector<8x128xf32>
    %41 = arith.mulf %40, %37 : vector<8x128xf32>
    %cst_18 = arith.constant 4.471500e-02 : f32
    %42 = vector.broadcast %cst_18 : f32 to vector<8x128xf32>
    %43 = arith.mulf %42, %41 : vector<8x128xf32>
    %44 = arith.addf %37, %43 : vector<8x128xf32>
    %cst_19 = arith.constant 0.797884583 : f32
    %45 = vector.broadcast %cst_19 : f32 to vector<8x128xf32>
    %46 = arith.mulf %45, %44 : vector<8x128xf32>
    %47 = math.tanh %46 : vector<8x128xf32>
    %cst_20 = arith.constant 1.000000e+00 : f32
    %48 = vector.broadcast %cst_20 : f32 to vector<8x128xf32>
    %49 = arith.addf %48, %47 : vector<8x128xf32>
    %50 = arith.mulf %39, %49 : vector<8x128xf32>
    %c0_21 = arith.constant 0 : index
    %c0_22 = arith.constant 0 : index
    %51 = vector.load %arg3[%c0_21, %c0_22] : memref<128x128xf32, #tpu.memory_space<vmem>>, vector<128x128xf32>
    %cst_23 = arith.constant dense<0.000000e+00> : vector<8x128xf32>
    %52 = tpu.matmul %50, %51, %cst_23 {dimension_numbers = #tpu.dot_dimension_numbers<[1], [0], [0], [1], [0, 0, 1, 1], [], []>} : vector<8x128xf32>, vector<128x128xf32>, vector<8x128xf32> -> vector<8x128xf32>
    %53 = vector.extract_strided_slice %0 {offsets = [1, 0], sizes = [1, 128], strides = [1, 1]} : vector<6x128xf32> to vector<1x128xf32>
    %54 = vector.shape_cast %53 : vector<1x128xf32> to vector<128xf32>
    %55 = vector.shape_cast %54 : vector<128xf32> to vector<1x128xf32>
    %56 = vector.broadcast %55 : vector<1x128xf32> to vector<8x128xf32>
    %57 = arith.addf %52, %56 : vector<8x128xf32>
    %58 = vector.shape_cast %57 : vector<8x128xf32> to vector<1x8x128xf32>
    %cst_24 = arith.constant dense<0.000000e+00> : vector<1x128xf32>
    %59 = vector.multi_reduction <add>, %58, %cst_24 [1] : vector<1x8x128xf32> to vector<1x128xf32>
    %60 = arith.mulf %58, %58 : vector<1x8x128xf32>
    %cst_25 = arith.constant dense<0.000000e+00> : vector<1x128xf32>
    %61 = vector.multi_reduction <add>, %60, %cst_25 [1] : vector<1x8x128xf32> to vector<1x128xf32>
    %cst_26 = arith.constant dense<0.000000e+00> : vector<1x4xf32>
    %62 = tpu.matmul %59, %1, %cst_26 {dimension_numbers = #tpu.dot_dimension_numbers<[1], [0], [0], [1], [0, 0, 1, 1], [], []>} : vector<1x128xf32>, vector<128x4xf32>, vector<1x4xf32> -> vector<1x4xf32>
    %cst_27 = arith.constant dense<0.000000e+00> : vector<1x4xf32>
    %63 = tpu.matmul %61, %1, %cst_27 {dimension_numbers = #tpu.dot_dimension_numbers<[1], [0], [0], [1], [0, 0, 1, 1], [], []>} : vector<1x128xf32>, vector<128x4xf32>, vector<1x4xf32> -> vector<1x4xf32>
    %64 = arith.mulf %62, %62 : vector<1x4xf32>
    %65 = arith.subf %63, %64 : vector<1x4xf32>
    %cst_28 = arith.constant 9.99999974E-6 : f32
    %66 = vector.broadcast %cst_28 : f32 to vector<1x4xf32>
    %67 = arith.addf %65, %66 : vector<1x4xf32>
    %68 = math.rsqrt %67 : vector<1x4xf32>
    %c1 = arith.constant 1 : index
    %c0_29 = arith.constant 0 : index
    %c0_30 = arith.constant 0 : index
    %69 = vector.load %arg7[%c1, %c0_29, %c0_30] : memref<3x4x128xf32, #tpu.memory_space<vmem>>, vector<1x4x128xf32>
    %70 = vector.shape_cast %69 : vector<1x4x128xf32> to vector<4x128xf32>
    %cst_31 = arith.constant dense<0.000000e+00> : vector<1x128xf32>
    %71 = tpu.matmul %68, %70, %cst_31 {dimension_numbers = #tpu.dot_dimension_numbers<[1], [0], [0], [1], [0, 0, 1, 1], [], []>} : vector<1x4xf32>, vector<4x128xf32>, vector<1x128xf32> -> vector<1x128xf32>
    %72 = arith.mulf %62, %68 : vector<1x4xf32>
    %cst_32 = arith.constant dense<0.000000e+00> : vector<1x128xf32>
    %73 = tpu.matmul %72, %70, %cst_32 {dimension_numbers = #tpu.dot_dimension_numbers<[1], [0], [0], [1], [0, 0, 1, 1], [], []>} : vector<1x4xf32>, vector<4x128xf32>, vector<1x128xf32> -> vector<1x128xf32>
    %74 = vector.shape_cast %71 : vector<1x128xf32> to vector<1x1x128xf32>
    %75 = vector.broadcast %74 : vector<1x1x128xf32> to vector<1x8x128xf32>
    %76 = arith.mulf %58, %75 : vector<1x8x128xf32>
    %77 = vector.shape_cast %73 : vector<1x128xf32> to vector<1x1x128xf32>
    %78 = vector.broadcast %77 : vector<1x1x128xf32> to vector<1x8x128xf32>
    %79 = arith.subf %76, %78 : vector<1x8x128xf32>
    %80 = vector.shape_cast %79 : vector<1x8x128xf32> to vector<8x128xf32>
    %81 = vector.extract_strided_slice %0 {offsets = [4, 0], sizes = [1, 128], strides = [1, 1]} : vector<6x128xf32> to vector<1x128xf32>
    %82 = vector.shape_cast %81 : vector<1x128xf32> to vector<128xf32>
    %83 = vector.shape_cast %82 : vector<128xf32> to vector<1x128xf32>
    %84 = vector.broadcast %83 : vector<1x128xf32> to vector<8x128xf32>
    %85 = arith.addf %80, %84 : vector<8x128xf32>
    %cst_33 = arith.constant 5.000000e-01 : f32
    %86 = vector.broadcast %cst_33 : f32 to vector<8x128xf32>
    %87 = arith.mulf %86, %85 : vector<8x128xf32>
    %88 = arith.mulf %85, %85 : vector<8x128xf32>
    %89 = arith.mulf %88, %85 : vector<8x128xf32>
    %cst_34 = arith.constant 4.471500e-02 : f32
    %90 = vector.broadcast %cst_34 : f32 to vector<8x128xf32>
    %91 = arith.mulf %90, %89 : vector<8x128xf32>
    %92 = arith.addf %85, %91 : vector<8x128xf32>
    %cst_35 = arith.constant 0.797884583 : f32
    %93 = vector.broadcast %cst_35 : f32 to vector<8x128xf32>
    %94 = arith.mulf %93, %92 : vector<8x128xf32>
    %95 = math.tanh %94 : vector<8x128xf32>
    %cst_36 = arith.constant 1.000000e+00 : f32
    %96 = vector.broadcast %cst_36 : f32 to vector<8x128xf32>
    %97 = arith.addf %96, %95 : vector<8x128xf32>
    %98 = arith.mulf %87, %97 : vector<8x128xf32>
    %c0_37 = arith.constant 0 : index
    %c0_38 = arith.constant 0 : index
    %99 = vector.load %arg4[%c0_37, %c0_38] : memref<128x128xf32, #tpu.memory_space<vmem>>, vector<128x128xf32>
    %cst_39 = arith.constant dense<0.000000e+00> : vector<8x128xf32>
    %100 = tpu.matmul %98, %99, %cst_39 {dimension_numbers = #tpu.dot_dimension_numbers<[1], [0], [0], [1], [0, 0, 1, 1], [], []>} : vector<8x128xf32>, vector<128x128xf32>, vector<8x128xf32> -> vector<8x128xf32>
    %101 = vector.extract_strided_slice %0 {offsets = [2, 0], sizes = [1, 128], strides = [1, 1]} : vector<6x128xf32> to vector<1x128xf32>
    %102 = vector.shape_cast %101 : vector<1x128xf32> to vector<128xf32>
    %103 = vector.shape_cast %102 : vector<128xf32> to vector<1x128xf32>
    %104 = vector.broadcast %103 : vector<1x128xf32> to vector<8x128xf32>
    %105 = arith.addf %100, %104 : vector<8x128xf32>
    %106 = vector.shape_cast %105 : vector<8x128xf32> to vector<1x8x128xf32>
    %cst_40 = arith.constant dense<0.000000e+00> : vector<1x128xf32>
    %107 = vector.multi_reduction <add>, %106, %cst_40 [1] : vector<1x8x128xf32> to vector<1x128xf32>
    %108 = arith.mulf %106, %106 : vector<1x8x128xf32>
    %cst_41 = arith.constant dense<0.000000e+00> : vector<1x128xf32>
    %109 = vector.multi_reduction <add>, %108, %cst_41 [1] : vector<1x8x128xf32> to vector<1x128xf32>
    %cst_42 = arith.constant dense<0.000000e+00> : vector<1x4xf32>
    %110 = tpu.matmul %107, %1, %cst_42 {dimension_numbers = #tpu.dot_dimension_numbers<[1], [0], [0], [1], [0, 0, 1, 1], [], []>} : vector<1x128xf32>, vector<128x4xf32>, vector<1x4xf32> -> vector<1x4xf32>
    %cst_43 = arith.constant dense<0.000000e+00> : vector<1x4xf32>
    %111 = tpu.matmul %109, %1, %cst_43 {dimension_numbers = #tpu.dot_dimension_numbers<[1], [0], [0], [1], [0, 0, 1, 1], [], []>} : vector<1x128xf32>, vector<128x4xf32>, vector<1x4xf32> -> vector<1x4xf32>
    %112 = arith.mulf %110, %110 : vector<1x4xf32>
    %113 = arith.subf %111, %112 : vector<1x4xf32>
    %cst_44 = arith.constant 9.99999974E-6 : f32
    %114 = vector.broadcast %cst_44 : f32 to vector<1x4xf32>
    %115 = arith.addf %113, %114 : vector<1x4xf32>
    %116 = math.rsqrt %115 : vector<1x4xf32>
    %c2 = arith.constant 2 : index
    %c0_45 = arith.constant 0 : index
    %c0_46 = arith.constant 0 : index
    %117 = vector.load %arg7[%c2, %c0_45, %c0_46] : memref<3x4x128xf32, #tpu.memory_space<vmem>>, vector<1x4x128xf32>
    %118 = vector.shape_cast %117 : vector<1x4x128xf32> to vector<4x128xf32>
    %cst_47 = arith.constant dense<0.000000e+00> : vector<1x128xf32>
    %119 = tpu.matmul %116, %118, %cst_47 {dimension_numbers = #tpu.dot_dimension_numbers<[1], [0], [0], [1], [0, 0, 1, 1], [], []>} : vector<1x4xf32>, vector<4x128xf32>, vector<1x128xf32> -> vector<1x128xf32>
    %120 = arith.mulf %110, %116 : vector<1x4xf32>
    %cst_48 = arith.constant dense<0.000000e+00> : vector<1x128xf32>
    %121 = tpu.matmul %120, %118, %cst_48 {dimension_numbers = #tpu.dot_dimension_numbers<[1], [0], [0], [1], [0, 0, 1, 1], [], []>} : vector<1x4xf32>, vector<4x128xf32>, vector<1x128xf32> -> vector<1x128xf32>
    %122 = vector.shape_cast %119 : vector<1x128xf32> to vector<1x1x128xf32>
    %123 = vector.broadcast %122 : vector<1x1x128xf32> to vector<1x8x128xf32>
    %124 = arith.mulf %106, %123 : vector<1x8x128xf32>
    %125 = vector.shape_cast %121 : vector<1x128xf32> to vector<1x1x128xf32>
    %126 = vector.broadcast %125 : vector<1x1x128xf32> to vector<1x8x128xf32>
    %127 = arith.subf %124, %126 : vector<1x8x128xf32>
    %128 = vector.shape_cast %127 : vector<1x8x128xf32> to vector<8x128xf32>
    %129 = vector.extract_strided_slice %0 {offsets = [5, 0], sizes = [1, 128], strides = [1, 1]} : vector<6x128xf32> to vector<1x128xf32>
    %130 = vector.shape_cast %129 : vector<1x128xf32> to vector<128xf32>
    %131 = vector.shape_cast %130 : vector<128xf32> to vector<1x128xf32>
    %132 = vector.broadcast %131 : vector<1x128xf32> to vector<8x128xf32>
    %133 = arith.addf %128, %132 : vector<8x128xf32>
    %cst_49 = arith.constant 5.000000e-01 : f32
    %134 = vector.broadcast %cst_49 : f32 to vector<8x128xf32>
    %135 = arith.mulf %134, %133 : vector<8x128xf32>
    %136 = arith.mulf %133, %133 : vector<8x128xf32>
    %137 = arith.mulf %136, %133 : vector<8x128xf32>
    %cst_50 = arith.constant 4.471500e-02 : f32
    %138 = vector.broadcast %cst_50 : f32 to vector<8x128xf32>
    %139 = arith.mulf %138, %137 : vector<8x128xf32>
    %140 = arith.addf %133, %139 : vector<8x128xf32>
    %cst_51 = arith.constant 0.797884583 : f32
    %141 = vector.broadcast %cst_51 : f32 to vector<8x128xf32>
    %142 = arith.mulf %141, %140 : vector<8x128xf32>
    %143 = math.tanh %142 : vector<8x128xf32>
    %cst_52 = arith.constant 1.000000e+00 : f32
    %144 = vector.broadcast %cst_52 : f32 to vector<8x128xf32>
    %145 = arith.addf %144, %143 : vector<8x128xf32>
    %146 = arith.mulf %135, %145 : vector<8x128xf32>
    %c0_53 = arith.constant 0 : index
    %c0_54 = arith.constant 0 : index
    %147 = vector.load %arg8[%c0_53, %c0_54] : memref<8x128xf32, #tpu.memory_space<vmem>>, vector<8x128xf32>
    tpu.vector_store %arg8[%c0_53, %c0_54], %146 {strides = array<i32>} : memref<8x128xf32, #tpu.memory_space<vmem>>, vector<8x128xf32>,
    return
  }
  func.func @transform_0(%arg0: i32) -> (i32, i32) {
    %c0_i32 = arith.constant 0 : i32
    %c0_i32_0 = arith.constant 0 : i32
    return %arg0, %c0_i32 : i32, i32
  }
  func.func @transform_1(%arg0: i32) -> (i32, i32) {
    %c0_i32 = arith.constant 0 : i32
    %c0_i32_0 = arith.constant 0 : i32
    %c0_i32_1 = arith.constant 0 : i32
    return %c0_i32, %c0_i32_0 : i32, i32
  }
  func.func @transform_2(%arg0: i32) -> (i32, i32) {
    %c0_i32 = arith.constant 0 : i32
    %c0_i32_0 = arith.constant 0 : i32
    %c0_i32_1 = arith.constant 0 : i32
    return %c0_i32, %c0_i32_0 : i32, i32
  }
  func.func @transform_3(%arg0: i32) -> (i32, i32) {
    %c0_i32 = arith.constant 0 : i32
    %c0_i32_0 = arith.constant 0 : i32
    %c0_i32_1 = arith.constant 0 : i32
    return %c0_i32, %c0_i32_0 : i32, i32
  }
  func.func @transform_4(%arg0: i32) -> (i32, i32) {
    %c0_i32 = arith.constant 0 : i32
    %c0_i32_0 = arith.constant 0 : i32
    %c0_i32_1 = arith.constant 0 : i32
    return %c0_i32, %c0_i32_0 : i32, i32
  }
  func.func @transform_5(%arg0: i32) -> (i32, i32) {
    %c0_i32 = arith.constant 0 : i32
    %c0_i32_0 = arith.constant 0 : i32
    %c0_i32_1 = arith.constant 0 : i32
    return %c0_i32, %c0_i32_0 : i32, i32
  }
  func.func @transform_6(%arg0: i32) -> (i32, i32, i32) {
    %c0_i32 = arith.constant 0 : i32
    %c0_i32_0 = arith.constant 0 : i32
    %c0_i32_1 = arith.constant 0 : i32
    %c0_i32_2 = arith.constant 0 : i32
    return %c0_i32, %c0_i32_0, %c0_i32_1 : i32, i32, i32
  }
  func.func @transform_7(%arg0: i32) -> (i32, i32) {
    %c0_i32 = arith.constant 0 : i32
    %c0_i32_0 = arith.constant 0 : i32
    return %arg0, %c0_i32 : i32, i32
  }
}

</mosaic_0001>

<llo_original>
// kernel: tpu_custom_call.1
$region0: #{tpu_custom_call.1}
  #allocation0 [shape = 'u32[]', space=smem, size = 0x4, offset = 0x4, fixed_abs, tag = 'smem constant byte address 0x4 - core index']
  #allocation1 [shape = 'u32[144,128]{1,0:T(1,128)}', space=vmem, size = 0x12000, scoped, tag = 'internal scratch']
  %s0 = inlined_call_operand.hbm [shape: f32[16,64], index: 0, kind: input, shape index: {}]
  %s1 = inlined_call_operand.hbm [shape: f32[64,128], index: 1, kind: input, shape index: {}]
  %s2 = inlined_call_operand.vmem [shape: f32[128,128], index: 2, kind: input, shape index: {}]
  %s3 = inlined_call_operand.hbm [shape: f32[128,128], index: 3, kind: input, shape index: {}]
  %s4 = inlined_call_operand.hbm [shape: f32[6,128], index: 4, kind: input, shape index: {}]
  %s5 = inlined_call_operand.vmem [shape: f32[128,4], index: 5, kind: input, shape index: {}]
  %s6 = inlined_call_operand.vmem [shape: f32[3,4,128], index: 6, kind: input, shape index: {}]
  %s7 = inlined_call_operand.hbm [shape: f32[16,128], index: 7, kind: output, shape index: {}]
  %s8 = sld [smem:[#allocation0]]
  $region77: #{tpu_custom_call.1} parent=0
    _
  %s10 = ssub.s32 1, %s8
  %s11 = scalar_select 0, %s10, %s8
  $region1: #{tpu_custom_call.1} parent=0
    #allocation2 [shape = 'u8[8192]{0}', space=vmem, size = 0x2000, scoped, tag = 'input window, operand 0']
    #allocation3 [shape = 's32[2]{0}', space=sflag, size = 0x8, scoped, tag = 'scoped memory for tpu_custom_call.1']
    #allocation4 [shape = 's32[2]{0}', space=sflag, size = 0x8, scoped, tag = 'scoped memory for tpu_custom_call.1']
    #allocation5 [shape = 'u8[32768]{0}', space=vmem, size = 0x8000, scoped, tag = 'input window, operand 1, single buffered']
    #allocation6 [shape = 's32[1]{0}', space=sflag, size = 0x4, scoped, tag = 'scoped memory for tpu_custom_call.1']
    #allocation7 [shape = 'u8[65536]{0}', space=vmem, size = 0x10000, scoped, tag = 'input window, operand 3, single buffered']
    #allocation8 [shape = 'u8[4096]{0}', space=vmem, size = 0x1000, scoped, tag = 'input window, operand 4, single buffered']
    #allocation9 [shape = 's32[1]{0}', space=sflag, size = 0x4, scoped, tag = 'scoped memory for tpu_custom_call.1']
    #allocation10 [shape = 'u8[8192]{0}', space=vmem, size = 0x2000, scoped, tag = 'output window, operand 0']
    %12 = vsyncpa [#allocation3], 0
    %s13 = scalar_lea.sflag [#allocation3], 1
    %14 = vsyncpa %s13, 0
    %15 = vsyncpa [#allocation6], 0
    %16 = vsyncpa [#allocation9], 0
    %17 = vsyncpa [#allocation4], 0
    %s18 = scalar_lea.sflag [#allocation4], 1
    %19 = vsyncpa %s18, 0
    loop: start=0, step=1, limit=4
    $region2: #{tpu_custom_call.1} parent=1 // loop_pre_header
      _
    $region3: #{tpu_custom_call.1} parent=1 // loop_header
      %s21 = sphi 0, %s25
      %p22 = scmp.ge.s32.totalorder %s21, 4
      %s31 = sphi 0, %s33
      %s34 = sphi 0, %s31
      %s35 = sphi 0, %s34
      %s51 = sphi 0, %s35
      %s55 = sphi 0, %s55
      %s57 = sphi 0, %s55
      %s58 = sphi 0, %s57
      %s72 = sphi 0, %s58
      %s76 = sphi 0, %s76
      %s78 = sphi 0, %s76
      %s79 = sphi 0, %s78
      %s93 = sphi 0, %s79
      %s97 = sphi 0, %s97
      %s99 = sphi 0, %s97
      %s100 = sphi 0, %s99
      %s114 = sphi 0, %s100
      %s118 = sphi 0, %s118
      %s120 = sphi 0, %s118
      %s121 = sphi 0, %s120
      %s135 = sphi 0, %s121
      %s139 = sphi 0, %s139
      %s141 = sphi 0, %s139
      %s142 = sphi 0, %s141
      %s156 = sphi 0, %s142
      %s160 = sphi 0, %s160
      %s162 = sphi 0, %s160
      %s163 = sphi 0, %s162
      %s177 = sphi 0, %s163
      %s183 = sphi 0, %s185
      %s186 = sphi 0, %s183
      %s187 = sphi 0, %s186
      %s203 = sphi 0, %s187
    $region4: #{tpu_custom_call.1} parent=1 // loop_header_branch
      %24 = sbr.rel (%p22) target = $region8
    $region5: #{tpu_custom_call.1} parent=1 // loop_body
      %s26 = ssub.s32 %s21, 1
      %s27 = ssub.s32 %s21, 2
      %s28 = sadd.s32 %s21, 1
      %s29 = ssub.s32 %s21, %s28
      %p30 = scmp.eq.s32.totalorder %s29, 0
      %s32 = sadd.s32 %s31, 1
      %s33 = scalar_select %p30, %s31, %s32
      %p36 = pneg %p30
      %p37 = scmp.eq.s32.totalorder %s21, 1
      %p38 = por %p36, %p37
      %p39 = scmp.ne.s32.totalorder %s31, %s34
      %p40 = scmp.eq.s32.totalorder %s21, 0
      %p41 = por %p39, %p40
      %p42 = scmp.ne.s32.totalorder %s31, %s34
      %p43 = scmp.eq.s32.totalorder %s26, 1
      %p44 = por %p42, %p43
      %p45 = scmp.ne.s32.totalorder %s34, %s35
      %p46 = scmp.eq.s32.totalorder %s26, 0
      %p47 = por %p45, %p46
      %p48 = scmp.ne.s32.totalorder %s34, %s35
      %p49 = scmp.eq.s32.totalorder %s27, 1
      %p50 = por %p48, %p49
      %p52 = scmp.ne.s32.totalorder %s35, %s51
      %p53 = scmp.eq.s32.totalorder %s27, 0
      %p54 = por %p52, %p53
      %s56 = sadd.s32 %s55, 1
      %p59 = scmp.eq.s32.totalorder %s21, 1
      %p60 = scmp.ne.s32.totalorder %s55, %s57
      %p61 = scmp.eq.s32.totalorder %s21, 0
      %p62 = por %p60, %p61
      %p63 = scmp.ne.s32.totalorder %s55, %s57
      %p64 = scmp.eq.s32.totalorder %s26, 1
      %p65 = por %p63, %p64
      %p66 = scmp.ne.s32.totalorder %s57, %s58
      %p67 = scmp.eq.s32.totalorder %s26, 0
      %p68 = por %p66, %p67
      %p69 = scmp.ne.s32.totalorder %s57, %s58
      %p70 = scmp.eq.s32.totalorder %s27, 1
      %p71 = por %p69, %p70
      %p73 = scmp.ne.s32.totalorder %s58, %s72
      %p74 = scmp.eq.s32.totalorder %s27, 0
      %p75 = por %p73, %p74
      %s77 = sadd.s32 %s76, 1
      %p80 = scmp.eq.s32.totalorder %s21, 1
      %p81 = scmp.ne.s32.totalorder %s76, %s78
      %p82 = scmp.eq.s32.totalorder %s21, 0
      %p83 = por %p81, %p82
      %p84 = scmp.ne.s32.totalorder %s76, %s78
      %p85 = scmp.eq.s32.totalorder %s26, 1
      %p86 = por %p84, %p85
      %p87 = scmp.ne.s32.totalorder %s78, %s79
      %p88 = scmp.eq.s32.totalorder %s26, 0
      %p89 = por %p87, %p88
      %p90 = scmp.ne.s32.totalorder %s78, %s79
      %p91 = scmp.eq.s32.totalorder %s27, 1
      %p92 = por %p90, %p91
      %p94 = scmp.ne.s32.totalorder %s79, %s93
      %p95 = scmp.eq.s32.totalorder %s27, 0
      %p96 = por %p94, %p95
      %s98 = sadd.s32 %s97, 1
      %p101 = scmp.eq.s32.totalorder %s21, 1
      %p102 = scmp.ne.s32.totalorder %s97, %s99
      %p103 = scmp.eq.s32.totalorder %s21, 0
      %p104 = por %p102, %p103
      %p105 = scmp.ne.s32.totalorder %s97, %s99
      %p106 = scmp.eq.s32.totalorder %s26, 1
      %p107 = por %p105, %p106
      %p108 = scmp.ne.s32.totalorder %s99, %s100
      %p109 = scmp.eq.s32.totalorder %s26, 0
      %p110 = por %p108, %p109
      %p111 = scmp.ne.s32.totalorder %s99, %s100
      %p112 = scmp.eq.s32.totalorder %s27, 1
      %p113 = por %p111, %p112
      %p115 = scmp.ne.s32.totalorder %s100, %s114
      %p116 = scmp.eq.s32.totalorder %s27, 0
      %p117 = por %p115, %p116
      %s119 = sadd.s32 %s118, 1
      %p122 = scmp.eq.s32.totalorder %s21, 1
      %p123 = scmp.ne.s32.totalorder %s118, %s120
      %p124 = scmp.eq.s32.totalorder %s21, 0
      %p125 = por %p123, %p124
      %p126 = scmp.ne.s32.totalorder %s118, %s120
      %p127 = scmp.eq.s32.totalorder %s26, 1
      %p128 = por %p126, %p127
      %p129 = scmp.ne.s32.totalorder %s120, %s121
      %p130 = scmp.eq.s32.totalorder %s26, 0
      %p131 = por %p129, %p130
      %p132 = scmp.ne.s32.totalorder %s120, %s121
      %p133 = scmp.eq.s32.totalorder %s27, 1
      %p134 = por %p132, %p133
      %p136 = scmp.ne.s32.totalorder %s121, %s135
      %p137 = scmp.eq.s32.totalorder %s27, 0
      %p138 = por %p136, %p137
      %s140 = sadd.s32 %s139, 1
      %p143 = scmp.eq.s32.totalorder %s21, 1
      %p144 = scmp.ne.s32.totalorder %s139, %s141
      %p145 = scmp.eq.s32.totalorder %s21, 0
      %p146 = por %p144, %p145
      %p147 = scmp.ne.s32.totalorder %s139, %s141
      %p148 = scmp.eq.s32.totalorder %s26, 1
      %p149 = por %p147, %p148
      %p150 = scmp.ne.s32.totalorder %s141, %s142
      %p151 = scmp.eq.s32.totalorder %s26, 0
      %p152 = por %p150, %p151
      %p153 = scmp.ne.s32.totalorder %s141, %s142
      %p154 = scmp.eq.s32.totalorder %s27, 1
      %p155 = por %p153, %p154
      %p157 = scmp.ne.s32.totalorder %s142, %s156
      %p158 = scmp.eq.s32.totalorder %s27, 0
      %p159 = por %p157, %p158
      %s161 = sadd.s32 %s160, 1
      %p164 = scmp.eq.s32.totalorder %s21, 1
      %p165 = scmp.ne.s32.totalorder %s160, %s162
      %p166 = scmp.eq.s32.totalorder %s21, 0
      %p167 = por %p165, %p166
      %p168 = scmp.ne.s32.totalorder %s160, %s162
      %p169 = scmp.eq.s32.totalorder %s26, 1
      %p170 = por %p168, %p169
      %p171 = scmp.ne.s32.totalorder %s162, %s163
      %p172 = scmp.eq.s32.totalorder %s26, 0
      %p173 = por %p171, %p172
      %p174 = scmp.ne.s32.totalorder %s162, %s163
      %p175 = scmp.eq.s32.totalorder %s27, 1
      %p176 = por %p174, %p175
      %p178 = scmp.ne.s32.totalorder %s163, %s177
      %p179 = scmp.eq.s32.totalorder %s27, 0
      %p180 = por %p178, %p179
      %s181 = ssub.s32 %s21, %s28
      %p182 = scmp.eq.s32.totalorder %s181, 0
      %s184 = sadd.s32 %s183, 1
      %s185 = scalar_select %p182, %s183, %s184
      %p188 = pneg %p182
      %p189 = scmp.eq.s32.totalorder %s21, 1
      %p190 = por %p188, %p189
      %p191 = scmp.ne.s32.totalorder %s183, %s186
      %p192 = scmp.eq.s32.totalorder %s21, 0
      %p193 = por %p191, %p192
      %p194 = scmp.ne.s32.totalorder %s183, %s186
      %p195 = scmp.eq.s32.totalorder %s26, 1
      %p196 = por %p194, %p195
      %p197 = scmp.ne.s32.totalorder %s186, %s187
      %p198 = scmp.eq.s32.totalorder %s26, 0
      %p199 = por %p197, %p198
      %p200 = scmp.ne.s32.totalorder %s186, %s187
      %p201 = scmp.eq.s32.totalorder %s27, 1
      %p202 = por %p200, %p201
      %p204 = scmp.ne.s32.totalorder %s187, %s203
      %p205 = scmp.eq.s32.totalorder %s27, 0
      %p206 = por %p204, %p205
      %p207 = scmp.le.s32.totalorder 1, %s21
      %p208 = scmp.lt.s32.totalorder %s21, 3
      %p209 = pnand %p207, %p208
      %p210 = pneg %p209
      // Predicated region
      $region9: #{tpu_custom_call.1} parent=5 // pred_check
        _
      $region10: #{tpu_custom_call.1} parent=5 // pred_check_branch
        %212 = sbr.rel (%p209) target = $region12
      $region11: #{tpu_custom_call.1} parent=5 // pred_region
        %s213 = ssub.s32 %s21, 1
        // Predicated region
        $region13: #{tpu_custom_call.1} parent=11 // pred_check
          %p214 = pneg %p68
        $region14: #{tpu_custom_call.1} parent=11 // pred_check_branch
          %216 = sbr.rel (%p214) target = $region16
        $region15: #{tpu_custom_call.1} parent=11 // pred_region
          %s218 = ssub.s32 1024, 1024
          %219 = vsyncadd [#allocation6], %s218
          %s220 = sshll.u32 [#allocation5], 4
          %s221 = int_to_ptr.vmem [resolvable:$true] %s220
          %226 = dma.hbm_to_vmem [thread:$0]  %s1, 1024, %s221, [#allocation6], 128, 128, 8
        $region16: #{tpu_custom_call.1} parent=11 // pred_fallthru
          _
        // Predicated region
        $region17: #{tpu_custom_call.1} parent=11 // pred_check
          %p227 = pneg %p89
        $region18: #{tpu_custom_call.1} parent=11 // pred_check_branch
          %229 = sbr.rel (%p227) target = $region20
        $region19: #{tpu_custom_call.1} parent=11 // pred_region
          _
        $region20: #{tpu_custom_call.1} parent=11 // pred_fallthru
          _
        // Predicated region
        $region21: #{tpu_custom_call.1} parent=11 // pred_check
          %p230 = pneg %p110
        $region22: #{tpu_custom_call.1} parent=11 // pred_check_branch
          %232 = sbr.rel (%p230) target = $region24
        $region23: #{tpu_custom_call.1} parent=11 // pred_region
          %s234 = ssub.s32 2048, 2048
          %235 = vsyncadd [#allocation6], %s234
          %s236 = sshll.u32 [#allocation7], 4
          %s237 = int_to_ptr.vmem [resolvable:$true] %s236
          %242 = dma.hbm_to_vmem [thread:$0]  %s3, 2048, %s237, [#allocation6], 128, 128, 8
        $region24: #{tpu_custom_call.1} parent=11 // pred_fallthru
          _
        // Predicated region
        $region25: #{tpu_custom_call.1} parent=11 // pred_check
          %p243 = pneg %p131
        $region26: #{tpu_custom_call.1} parent=11 // pred_check_branch
          %245 = sbr.rel (%p243) target = $region28
        $region27: #{tpu_custom_call.1} parent=11 // pred_region
          %s247 = ssub.s32 128, 128
          %248 = vsyncadd [#allocation9], %s247
          %s250 = sshll.u32 [#allocation8], 4
          %s251 = int_to_ptr.vmem [resolvable:$true] %s250
          %253 = dma.hbm_to_vmem [thread:$0]  %s4, 128, %s251, [#allocation9]
        $region28: #{tpu_custom_call.1} parent=11 // pred_fallthru
          _
        // Predicated region
        $region29: #{tpu_custom_call.1} parent=11 // pred_check
          %p254 = pneg %p152
        $region30: #{tpu_custom_call.1} parent=11 // pred_check_branch
          %256 = sbr.rel (%p254) target = $region32
        $region31: #{tpu_custom_call.1} parent=11 // pred_region
          _
        $region32: #{tpu_custom_call.1} parent=11 // pred_fallthru
          _
        // Predicated region
        $region33: #{tpu_custom_call.1} parent=11 // pred_check
          %p257 = pneg %p173
        $region34: #{tpu_custom_call.1} parent=11 // pred_check_branch
          %259 = sbr.rel (%p257) target = $region36
        $region35: #{tpu_custom_call.1} parent=11 // pred_region
          _
        $region36: #{tpu_custom_call.1} parent=11 // pred_fallthru
          _
      $region12: #{tpu_custom_call.1} parent=5 // pred_fallthru
        _
      %p260 = scmp.lt.s32.totalorder %s21, 2
      // Predicated region
      $region37: #{tpu_custom_call.1} parent=5 // pred_check
        %p261 = pneg %p260
      $region38: #{tpu_custom_call.1} parent=5 // pred_check_branch
        %263 = sbr.rel (%p261) target = $region40
      $region39: #{tpu_custom_call.1} parent=5 // pred_region
        // Predicated region
        $region41: #{tpu_custom_call.1} parent=39 // pred_check
          %p264 = pneg %p41
        $region42: #{tpu_custom_call.1} parent=39 // pred_check_branch
          %266 = sbr.rel (%p264) target = $region44
        $region43: #{tpu_custom_call.1} parent=39 // pred_region
          %s267 = sand.u32 %s31, 1
          %s268 = scalar_lea.sflag [#allocation3], %s267
          %s269 = sand.u32 %s31, 1
          %s270 = smul.addr %s269, 8
          %s271 = scalar_lea.vmem [#allocation2], %s270
          %s273 = ssub.s32 128, 128
          %274 = vsyncadd %s268, %s273
          %s275 = smul.addr %s21, 128
          %s276 = scalar_lea.hbm %s0, %s275
          %s278 = sshll.u32 %s271, 4
          %s279 = int_to_ptr.vmem [resolvable:$true] %s278
          %281 = dma.hbm_to_vmem [thread:$0]  %s276, 128, %s279, %s268
        $region44: #{tpu_custom_call.1} parent=39 // pred_fallthru
          _
      $region40: #{tpu_custom_call.1} parent=5 // pred_fallthru
        _
      %p282 = scmp.le.s32.totalorder 1, %s21
      %p283 = scmp.lt.s32.totalorder %s21, 3
      %p284 = pnand %p282, %p283
      %p285 = pneg %p284
      // Predicated region
      $region45: #{tpu_custom_call.1} parent=5 // pred_check
        _
      $region46: #{tpu_custom_call.1} parent=5 // pred_check_branch
        %287 = sbr.rel (%p284) target = $region48
      $region47: #{tpu_custom_call.1} parent=5 // pred_region
        %s288 = ssub.s32 %s21, 1
        %s289 = sand.u32 %s34, 1
        %s290 = scalar_lea.sflag [#allocation3], %s289
        %s291 = sand.u32 %s34, 1
        %s292 = smul.addr %s291, 8
        %s293 = scalar_lea.vmem [#allocation2], %s292
        // Predicated region
        $region49: #{tpu_custom_call.1} parent=47 // pred_check
          %p294 = pneg %p47
        $region50: #{tpu_custom_call.1} parent=47 // pred_check_branch
          %296 = sbr.rel (%p294) target = $region52
        $region51: #{tpu_custom_call.1} parent=47 // pred_region
          %297 = dma.done %s290, 128
        $region52: #{tpu_custom_call.1} parent=47 // pred_fallthru
          _
        // Predicated region
        $region53: #{tpu_custom_call.1} parent=47 // pred_check
          %p298 = pneg %p68
        $region54: #{tpu_custom_call.1} parent=47 // pred_check_branch
          %300 = sbr.rel (%p298) target = $region56
        $region55: #{tpu_custom_call.1} parent=47 // pred_region
          %301 = dma.done [#allocation6], 1024
        $region56: #{tpu_custom_call.1} parent=47 // pred_fallthru
          _
        // Predicated region
        $region57: #{tpu_custom_call.1} parent=47 // pred_check
          %p302 = pneg %p110
        $region58: #{tpu_custom_call.1} parent=47 // pred_check_branch
          %304 = sbr.rel (%p302) target = $region60
        $region59: #{tpu_custom_call.1} parent=47 // pred_region
          %305 = dma.done [#allocation6], 2048
        $region60: #{tpu_custom_call.1} parent=47 // pred_fallthru
          _
        // Predicated region
        $region61: #{tpu_custom_call.1} parent=47 // pred_check
          %p306 = pneg %p131
        $region62: #{tpu_custom_call.1} parent=47 // pred_check_branch
          %308 = sbr.rel (%p306) target = $region64
        $region63: #{tpu_custom_call.1} parent=47 // pred_region
          %309 = dma.done [#allocation9], 128
        $region64: #{tpu_custom_call.1} parent=47 // pred_fallthru
          _
        %s310 = sand.u32 %s34, 1
        %s311 = scalar_lea.sflag [#allocation3], %s310
        %s312 = sand.u32 %s34, 1
        %s313 = smul.addr %s312, 8
        %s314 = scalar_lea.vmem [#allocation2], %s313
        %p315 = pneg %p47
        %p316 = pneg %p44
        %p317 = pneg %p68
        %p318 = pneg %p65
        %p319 = pneg %p89
        %p320 = pneg %p86
        %p321 = pneg %p110
        %p322 = pneg %p107
        %p323 = pneg %p131
        %p324 = pneg %p128
        %p325 = pneg %p152
        %p326 = pneg %p149
        %p327 = pneg %p173
        %p328 = pneg %p170
        %p329 = pneg %p199
        %p330 = pneg %p196
        %s331 = sand.u32 %s186, 1
        %s332 = scalar_lea.sflag [#allocation4], %s331
        %s333 = sand.u32 %s186, 1
        %s334 = smul.addr %s333, 8
        %s335 = scalar_lea.vmem [#allocation10], %s334
        %v336 = vld [vmem:[#allocation8] sm:$0x3f]
        %v337 = vld [vmem:[%s5] sm:$0xff]
        %v338 = vld [vmem:[%s5 + $0x8] sm:$0xff]
        %v339 = vld [vmem:[%s5 + $0x10] sm:$0xff]
        %v340 = vld [vmem:[%s5 + $0x18] sm:$0xff]
        %v341 = vld [vmem:[%s5 + $0x20] sm:$0xff]
        %v342 = vld [vmem:[%s5 + $0x28] sm:$0xff]
        %v343 = vld [vmem:[%s5 + $0x30] sm:$0xff]
        %v344 = vld [vmem:[%s5 + $0x38] sm:$0xff]
        %v345 = vld [vmem:[%s5 + $0x40] sm:$0xff]
        %v346 = vld [vmem:[%s5 + $0x48] sm:$0xff]
        %v347 = vld [vmem:[%s5 + $0x50] sm:$0xff]
        %v348 = vld [vmem:[%s5 + $0x58] sm:$0xff]
        %v349 = vld [vmem:[%s5 + $0x60] sm:$0xff]
        %v350 = vld [vmem:[%s5 + $0x68] sm:$0xff]
        %v351 = vld [vmem:[%s5 + $0x70] sm:$0xff]
        %v352 = vld [vmem:[%s5 + $0x78] sm:$0xff]
        %v353 = vld [vmem:[%s293] sm:$0xff]
        %v354 = vld [vmem:[#allocation5] sm:$0xff]
        %v355 = vld [vmem:[#allocation5 + $0x8] sm:$0xff]
        %v356 = vld [vmem:[#allocation5 + $0x10] sm:$0xff]
        %v357 = vld [vmem:[#allocation5 + $0x18] sm:$0xff]
        %v358 = vld [vmem:[#allocation5 + $0x20] sm:$0xff]
        %v359 = vld [vmem:[#allocation5 + $0x28] sm:$0xff]
        %v360 = vld [vmem:[#allocation5 + $0x30] sm:$0xff]
        %v361 = vld [vmem:[#allocation5 + $0x38] sm:$0xff]
        %v362 = vlaneseq
        %v363 = vshrl.u32 %v362, 7
        %v364 = vsub.s32 0, %v363
        %v365 = vrot.slane %v336, %v364
        %vm366 = vcmask 523264
        %v368 = vsel %vm366, %v353, 0
        %370 = vmatprep.subr.mxu0 0.0
        %371 = vmatpush1.msra.mxu0 %v354
        %372 = vmatprep.subr.mxu0 0.0
        %373 = vmatpush1.msra.mxu0 %v355
        %374 = vmatprep.subr.mxu0 0.0
        %375 = vmatpush1.msra.mxu0 %v356
        %376 = vmatprep.subr.mxu0 0.0
        %377 = vmatpush1.msra.mxu0 %v357
        %378 = vmatprep.subr.mxu0 0.0
        %379 = vmatpush1.msra.mxu0 %v358
        %380 = vmatprep.subr.mxu0 0.0
        %381 = vmatpush1.msra.mxu0 %v359
        %382 = vmatprep.subr.mxu0 0.0
        %383 = vmatpush1.msra.mxu0 %v360
        %384 = vmatprep.subr.mxu0 0.0
        %385 = vmatpush1.msra.mxu0 %v361
        %386 = vmatprep.subr.mxu0 0.0
        %387 = vmatpush1.msra.mxu0 0.0
        %388 = vmatprep.subr.mxu0 0.0
        %389 = vmatpush1.msra.mxu0 0.0
        %390 = vmatprep.subr.mxu0 0.0
        %391 = vmatpush1.msra.mxu0 0.0
        %392 = vmatprep.subr.mxu0 0.0
        %393 = vmatpush1.msra.mxu0 0.0
        %394 = vmatprep.subr.mxu0 0.0
        %395 = vmatpush1.msra.mxu0 0.0
        %396 = vmatprep.subr.mxu0 0.0
        %397 = vmatpush1.msra.mxu0 0.0
        %398 = vmatprep.subr.mxu0 0.0
        %399 = vmatpush1.msra.mxu0 0.0
        %400 = vmatprep.subr.mxu0 0.0
        %401 = vmatpush1.msra.mxu0 0.0
        %402 = vmatprep.subr.mxu0 0.0
        %403 = vmatpush1.msra.mxu0 0.0
        %404 = vmatprep.subr.mxu0 0.0
        %405 = vmatpush1.msra.mxu0 0.0
        %406 = vmatprep.subr.mxu0 0.0
        %407 = vmatpush1.msra.mxu0 0.0
        %408 = vmatprep.subr.mxu0 0.0
        %409 = vmatpush1.msra.mxu0 0.0
        %410 = vmatprep.subr.mxu0 0.0
        %411 = vmatpush1.msra.mxu0 0.0
        %412 = vmatprep.subr.mxu0 0.0
        %413 = vmatpush1.msra.mxu0 0.0
        %414 = vmatprep.subr.mxu0 0.0
        %415 = vmatpush1.msra.mxu0 0.0
        %416 = vmatprep.subr.mxu0 0.0
        %417 = vmatpush1.msra.mxu0 0.0
        %418 = vmatprep.subr.mxu0 0.0
        %419 = vmatpush1.msra.mxu0 0.0
        %420 = vmatprep.subr.mxu0 0.0
        %421 = vmatpush1.msra.mxu0 0.0
        %422 = vmatprep.subr.mxu0 0.0
        %423 = vmatpush1.msra.mxu0 0.0
        %424 = vmatprep.subr.mxu0 0.0
        %425 = vmatpush1.msra.mxu0 0.0
        %426 = vmatprep.subr.mxu0 0.0
        %427 = vmatpush1.msra.mxu0 0.0
        %428 = vmatprep.subr.mxu0 0.0
        %429 = vmatpush1.msra.mxu0 0.0
        %430 = vmatprep.subr.mxu0 0.0
        %431 = vmatpush1.msra.mxu0 0.0
        %432 = vmatprep.subr.mxu0 0.0
        %433 = vmatpush1.msra.mxu0 0.0
        %434 = vmatprep.mubr.f32.mxu0 0.0
        %435 = vmatmul.mubr.f32.gmra.mrb[0].mxu0 %v368
        %v436 = vpop.f32.mrb[0].mxu0
        %v437 = vadd.f32 %v365, %v436
        %v438 = vpop.f32.mrb[0].mxu0
        %439 = vdwg.mxu0
        %v440 = vrot.slane %v437, 4
        %v441 = vadd.f32 %v437, %v440
        %v442 = vrot.slane %v441, 2
        %v443 = vadd.f32 %v441, %v442
        %v444 = vrot.slane %v443, 1
        %v445 = vadd.f32 %v443, %v444
        %v446 = vmul.f32 %v437, %v437
        %v447 = vrot.slane %v446, 4
        %v448 = vadd.f32 %v446, %v447
        %v449 = vrot.slane %v448, 2
        %v450 = vadd.f32 %v448, %v449
        %v451 = vrot.slane %v450, 1
        %v452 = vadd.f32 %v450, %v451
        %453 = vmatprep.subr.mxu0 0.0
        %454 = vmatpush1.msra.mxu0 %v337
        %455 = vmatprep.subr.mxu0 0.0
        %456 = vmatpush1.msra.mxu0 %v338
        %457 = vmatprep.subr.mxu0 0.0
        %458 = vmatpush1.msra.mxu0 %v339
        %459 = vmatprep.subr.mxu0 0.0
        %460 = vmatpush1.msra.mxu0 %v340
        %461 = vmatprep.subr.mxu0 0.0
        %462 = vmatpush1.msra.mxu0 %v341
        %463 = vmatprep.subr.mxu0 0.0
        %464 = vmatpush1.msra.mxu0 %v342
        %465 = vmatprep.subr.mxu0 0.0
        %466 = vmatpush1.msra.mxu0 %v343
        %467 = vmatprep.subr.mxu0 0.0
        %468 = vmatpush1.msra.mxu0 %v344
        %469 = vmatprep.subr.mxu0 0.0
        %470 = vmatpush1.msra.mxu0 %v345
        %471 = vmatprep.subr.mxu0 0.0
        %472 = vmatpush1.msra.mxu0 %v346
        %473 = vmatprep.subr.mxu0 0.0
        %474 = vmatpush1.msra.mxu0 %v347
        %475 = vmatprep.subr.mxu0 0.0
        %476 = vmatpush1.msra.mxu0 %v348
        %477 = vmatprep.subr.mxu0 0.0
        %478 = vmatpush1.msra.mxu0 %v349
        %479 = vmatprep.subr.mxu0 0.0
        %480 = vmatpush1.msra.mxu0 %v350
        %481 = vmatprep.subr.mxu0 0.0
        %482 = vmatpush1.msra.mxu0 %v351
        %483 = vmatprep.subr.mxu0 0.0
        %484 = vmatpush1.msra.mxu0 %v352
        %485 = vmatprep.subr.mxu0 0.0
        %486 = vmatpush1.msra.mxu0 0.0
        %487 = vmatprep.subr.mxu0 0.0
        %488 = vmatpush1.msra.mxu0 0.0
        %489 = vmatprep.subr.mxu0 0.0
        %490 = vmatpush1.msra.mxu0 0.0
        %491 = vmatprep.subr.mxu0 0.0
        %492 = vmatpush1.msra.mxu0 0.0
        %493 = vmatprep.subr.mxu0 0.0
        %494 = vmatpush1.msra.mxu0 0.0
        %495 = vmatprep.subr.mxu0 0.0
        %496 = vmatpush1.msra.mxu0 0.0
        %497 = vmatprep.subr.mxu0 0.0
        %498 = vmatpush1.msra.mxu0 0.0
        %499 = vmatprep.subr.mxu0 0.0
        %500 = vmatpush1.msra.mxu0 0.0
        %501 = vmatprep.subr.mxu0 0.0
        %502 = vmatpush1.msra.mxu0 0.0
        %503 = vmatprep.subr.mxu0 0.0
        %504 = vmatpush1.msra.mxu0 0.0
        %505 = vmatprep.subr.mxu0 0.0
        %506 = vmatpush1.msra.mxu0 0.0
        %507 = vmatprep.subr.mxu0 0.0
        %508 = vmatpush1.msra.mxu0 0.0
        %509 = vmatprep.subr.mxu0 0.0
        %510 = vmatpush1.msra.mxu0 0.0
        %511 = vmatprep.subr.mxu0 0.0
        %512 = vmatpush1.msra.mxu0 0.0
        %513 = vmatprep.subr.mxu0 0.0
        %514 = vmatpush1.msra.mxu0 0.0
        %515 = vmatprep.subr.mxu0 0.0
        %516 = vmatpush1.msra.mxu0 0.0
        %517 = vmatprep.mubr.f32.mxu0 0.0
        %518 = vmatmul.mubr.f32.gmra.mrb[0].mxu0 %v445
        %v519 = vpop.f32.mrb[0].mxu0
        %v520 = vadd.f32 0.0, %v519
        %v521 = vpop.f32.mrb[0].mxu0
        %522 = vdwg.mxu0
        %523 = vmatprep.subr.mxu0 0.0
        %524 = vmatpush1.msra.mxu0 %v337
        %525 = vmatprep.subr.mxu0 0.0
        %526 = vmatpush1.msra.mxu0 %v338
        %527 = vmatprep.subr.mxu0 0.0
        %528 = vmatpush1.msra.mxu0 %v339
        %529 = vmatprep.subr.mxu0 0.0
        %530 = vmatpush1.msra.mxu0 %v340
        %531 = vmatprep.subr.mxu0 0.0
        %532 = vmatpush1.msra.mxu0 %v341
        %533 = vmatprep.subr.mxu0 0.0
        %534 = vmatpush1.msra.mxu0 %v342
        %535 = vmatprep.subr.mxu0 0.0
        %536 = vmatpush1.msra.mxu0 %v343
        %537 = vmatprep.subr.mxu0 0.0
        %538 = vmatpush1.msra.mxu0 %v344
        %539 = vmatprep.subr.mxu0 0.0
        %540 = vmatpush1.msra.mxu0 %v345
        %541 = vmatprep.subr.mxu0 0.0
        %542 = vmatpush1.msra.mxu0 %v346
        %543 = vmatprep.subr.mxu0 0.0
        %544 = vmatpush1.msra.mxu0 %v347
        %545 = vmatprep.subr.mxu0 0.0
        %546 = vmatpush1.msra.mxu0 %v348
        %547 = vmatprep.subr.mxu0 0.0
        %548 = vmatpush1.msra.mxu0 %v349
        %549 = vmatprep.subr.mxu0 0.0
        %550 = vmatpush1.msra.mxu0 %v350
        %551 = vmatprep.subr.mxu0 0.0
        %552 = vmatpush1.msra.mxu0 %v351
        %553 = vmatprep.subr.mxu0 0.0
        %554 = vmatpush1.msra.mxu0 %v352
        %555 = vmatprep.subr.mxu0 0.0
        %556 = vmatpush1.msra.mxu0 0.0
        %557 = vmatprep.subr.mxu0 0.0
        %558 = vmatpush1.msra.mxu0 0.0
        %559 = vmatprep.subr.mxu0 0.0
        %560 = vmatpush1.msra.mxu0 0.0
        %561 = vmatprep.subr.mxu0 0.0
        %562 = vmatpush1.msra.mxu0 0.0
        %563 = vmatprep.subr.mxu0 0.0
        %564 = vmatpush1.msra.mxu0 0.0
        %565 = vmatprep.subr.mxu0 0.0
        %566 = vmatpush1.msra.mxu0 0.0
        %567 = vmatprep.subr.mxu0 0.0
        %568 = vmatpush1.msra.mxu0 0.0
        %569 = vmatprep.subr.mxu0 0.0
        %570 = vmatpush1.msra.mxu0 0.0
        %571 = vmatprep.subr.mxu0 0.0
        %572 = vmatpush1.msra.mxu0 0.0
        %573 = vmatprep.subr.mxu0 0.0
        %574 = vmatpush1.msra.mxu0 0.0
        %575 = vmatprep.subr.mxu0 0.0
        %576 = vmatpush1.msra.mxu0 0.0
        %577 = vmatprep.subr.mxu0 0.0
        %578 = vmatpush1.msra.mxu0 0.0
        %579 = vmatprep.subr.mxu0 0.0
        %580 = vmatpush1.msra.mxu0 0.0
        %581 = vmatprep.subr.mxu0 0.0
        %582 = vmatpush1.msra.mxu0 0.0
        %583 = vmatprep.subr.mxu0 0.0
        %584 = vmatpush1.msra.mxu0 0.0
        %585 = vmatprep.subr.mxu0 0.0
        %586 = vmatpush1.msra.mxu0 0.0
        %587 = vmatprep.mubr.f32.mxu0 0.0
        %588 = vmatmul.mubr.f32.gmra.mrb[0].mxu0 %v452
        %v589 = vpop.f32.mrb[0].mxu0
        %v590 = vadd.f32 0.0, %v589
        %v591 = vpop.f32.mrb[0].mxu0
        %592 = vdwg.mxu0
        %v593 = vmul.f32 %v520, %v520
        %v594 = vsub.f32 %v590, %v593
        %v595 = vadd.f32 %v594, 1e-05
        %v596 = vrsqrt.pop %v595
        %v597 = vld [vmem:[%s6] sm:$0xf]
        %vm598 = vcmask 31744
        %v600 = vsel %vm598, %v596, 0
        %vm602 = vcmask 1043456
        %v604 = vsel %vm602, %v597, 0
        %606 = vmatprep.subr.mxu0 0.0
        %607 = vmatpush1.msra.mxu0 %v604
        %608 = vmatprep.subr.mxu0 0.0
        %609 = vmatpush1.msra.mxu0 0.0
        %610 = vmatprep.subr.mxu0 0.0
        %611 = vmatpush1.msra.mxu0 0.0
        %612 = vmatprep.subr.mxu0 0.0
        %613 = vmatpush1.msra.mxu0 0.0
        %614 = vmatprep.subr.mxu0 0.0
        %615 = vmatpush1.msra.mxu0 0.0
        %616 = vmatprep.subr.mxu0 0.0
        %617 = vmatpush1.msra.mxu0 0.0
        %618 = vmatprep.subr.mxu0 0.0
        %619 = vmatpush1.msra.mxu0 0.0
        %620 = vmatprep.subr.mxu0 0.0
        %621 = vmatpush1.msra.mxu0 0.0
        %622 = vmatprep.subr.mxu0 0.0
        %623 = vmatpush1.msra.mxu0 0.0
        %624 = vmatprep.subr.mxu0 0.0
        %625 = vmatpush1.msra.mxu0 0.0
        %626 = vmatprep.subr.mxu0 0.0
        %627 = vmatpush1.msra.mxu0 0.0
        %628 = vmatprep.subr.mxu0 0.0
        %629 = vmatpush1.msra.mxu0 0.0
        %630 = vmatprep.subr.mxu0 0.0
        %631 = vmatpush1.msra.mxu0 0.0
        %632 = vmatprep.subr.mxu0 0.0
        %633 = vmatpush1.msra.mxu0 0.0
        %634 = vmatprep.subr.mxu0 0.0
        %635 = vmatpush1.msra.mxu0 0.0
        %636 = vmatprep.subr.mxu0 0.0
        %637 = vmatpush1.msra.mxu0 0.0
        %638 = vmatprep.subr.mxu0 0.0
        %639 = vmatpush1.msra.mxu0 0.0
        %640 = vmatprep.subr.mxu0 0.0
        %641 = vmatpush1.msra.mxu0 0.0
        %642 = vmatprep.subr.mxu0 0.0
        %643 = vmatpush1.msra.mxu0 0.0
        %644 = vmatprep.subr.mxu0 0.0
        %645 = vmatpush1.msra.mxu0 0.0
        %646 = vmatprep.subr.mxu0 0.0
        %647 = vmatpush1.msra.mxu0 0.0
        %648 = vmatprep.subr.mxu0 0.0
        %649 = vmatpush1.msra.mxu0 0.0
        %650 = vmatprep.subr.mxu0 0.0
        %651 = vmatpush1.msra.mxu0 0.0
        %652 = vmatprep.subr.mxu0 0.0
        %653 = vmatpush1.msra.mxu0 0.0
        %654 = vmatprep.subr.mxu0 0.0
        %655 = vmatpush1.msra.mxu0 0.0
        %656 = vmatprep.subr.mxu0 0.0
        %657 = vmatpush1.msra.mxu0 0.0
        %658 = vmatprep.subr.mxu0 0.0
        %659 = vmatpush1.msra.mxu0 0.0
        %660 = vmatprep.subr.mxu0 0.0
        %661 = vmatpush1.msra.mxu0 0.0
        %662 = vmatprep.subr.mxu0 0.0
        %663 = vmatpush1.msra.mxu0 0.0
        %664 = vmatprep.subr.mxu0 0.0
        %665 = vmatpush1.msra.mxu0 0.0
        %666 = vmatprep.subr.mxu0 0.0
        %667 = vmatpush1.msra.mxu0 0.0
        %668 = vmatprep.subr.mxu0 0.0
        %669 = vmatpush1.msra.mxu0 0.0
        %670 = vmatprep.mubr.f32.mxu0 0.0
        %671 = vmatmul.mubr.f32.gmra.mrb[0].mxu0 %v600
        %v672 = vpop.f32.mrb[0].mxu0
        %v673 = vadd.f32 0.0, %v672
        %v674 = vpop.f32.mrb[0].mxu0
        %675 = vdwg.mxu0
        %v676 = vmul.f32 %v520, %v596
        %v678 = vsel %vm598, %v676, 0
        %680 = vmatprep.subr.mxu0 0.0
        %681 = vmatpush1.msra.mxu0 %v604
        %682 = vmatprep.subr.mxu0 0.0
        %683 = vmatpush1.msra.mxu0 0.0
        %684 = vmatprep.subr.mxu0 0.0
        %685 = vmatpush1.msra.mxu0 0.0
        %686 = vmatprep.subr.mxu0 0.0
        %687 = vmatpush1.msra.mxu0 0.0
        %688 = vmatprep.subr.mxu0 0.0
        %689 = vmatpush1.msra.mxu0 0.0
        %690 = vmatprep.subr.mxu0 0.0
        %691 = vmatpush1.msra.mxu0 0.0
        %692 = vmatprep.subr.mxu0 0.0
        %693 = vmatpush1.msra.mxu0 0.0
        %694 = vmatprep.subr.mxu0 0.0
        %695 = vmatpush1.msra.mxu0 0.0
        %696 = vmatprep.subr.mxu0 0.0
        %697 = vmatpush1.msra.mxu0 0.0
        %698 = vmatprep.subr.mxu0 0.0
        %699 = vmatpush1.msra.mxu0 0.0
        %700 = vmatprep.subr.mxu0 0.0
        %701 = vmatpush1.msra.mxu0 0.0
        %702 = vmatprep.subr.mxu0 0.0
        %703 = vmatpush1.msra.mxu0 0.0
        %704 = vmatprep.subr.mxu0 0.0
        %705 = vmatpush1.msra.mxu0 0.0
        %706 = vmatprep.subr.mxu0 0.0
        %707 = vmatpush1.msra.mxu0 0.0
        %708 = vmatprep.subr.mxu0 0.0
        %709 = vmatpush1.msra.mxu0 0.0
        %710 = vmatprep.subr.mxu0 0.0
        %711 = vmatpush1.msra.mxu0 0.0
        %712 = vmatprep.subr.mxu0 0.0
        %713 = vmatpush1.msra.mxu0 0.0
        %714 = vmatprep.subr.mxu0 0.0
        %715 = vmatpush1.msra.mxu0 0.0
        %716 = vmatprep.subr.mxu0 0.0
        %717 = vmatpush1.msra.mxu0 0.0
        %718 = vmatprep.subr.mxu0 0.0
        %719 = vmatpush1.msra.mxu0 0.0
        %720 = vmatprep.subr.mxu0 0.0
        %721 = vmatpush1.msra.mxu0 0.0
        %722 = vmatprep.subr.mxu0 0.0
        %723 = vmatpush1.msra.mxu0 0.0
        %724 = vmatprep.subr.mxu0 0.0
        %725 = vmatpush1.msra.mxu0 0.0
        %726 = vmatprep.subr.mxu0 0.0
        %727 = vmatpush1.msra.mxu0 0.0
        %728 = vmatprep.subr.mxu0 0.0
        %729 = vmatpush1.msra.mxu0 0.0
        %730 = vmatprep.subr.mxu0 0.0
        %731 = vmatpush1.msra.mxu0 0.0
        %732 = vmatprep.subr.mxu0 0.0
        %733 = vmatpush1.msra.mxu0 0.0
        %734 = vmatprep.subr.mxu0 0.0
        %735 = vmatpush1.msra.mxu0 0.0
        %736 = vmatprep.subr.mxu0 0.0
        %737 = vmatpush1.msra.mxu0 0.0
        %738 = vmatprep.subr.mxu0 0.0
        %739 = vmatpush1.msra.mxu0 0.0
        %740 = vmatprep.subr.mxu0 0.0
        %741 = vmatpush1.msra.mxu0 0.0
        %742 = vmatprep.subr.mxu0 0.0
        %743 = vmatpush1.msra.mxu0 0.0
        %744 = vmatprep.mubr.f32.mxu0 0.0
        %745 = vmatmul.mubr.f32.gmra.mrb[0].mxu0 %v678
        %v746 = vpop.f32.mrb[0].mxu0
        %v747 = vadd.f32 0.0, %v746
        %v748 = vpop.f32.mrb[0].mxu0
        %749 = vdwg.mxu0
        %v750 = vlaneseq
        %v751 = vshrl.u32 %v750, 7
        %v752 = vsub.s32 0, %v751
        %v753 = vrot.slane %v673, %v752
        %v754 = vmul.f32 %v437, %v753
        %v755 = vlaneseq
        %v756 = vshrl.u32 %v755, 7
        %v757 = vsub.s32 0, %v756
        %v758 = vrot.slane %v747, %v757
        %v759 = vsub.f32 %v754, %v758
        %v760 = vlaneseq
        %v761 = vshrl.u32 %v760, 7
        %v762 = vsub.s32 3, %v761
        %v763 = vrot.slane %v336, %v762
        %v764 = vadd.f32 %v759, %v763
        %v765 = vmul.f32 %v764, 0.5
        %v766 = vmul.f32 %v764, %v764
        %v767 = vmul.f32 %v766, %v764
        %v768 = vmul.f32 %v767, 0.044715
        %v769 = vadd.f32 %v764, %v768
        %v770 = vmul.f32 %v769, 0.7978846
        %v771 = vtanh.pop %v770
        %v772 = vadd.f32 %v771, 1.0
        %v773 = vmul.f32 %v765, %v772
        %v774 = vld [vmem:[%s2] sm:$0xff]
        %v775 = vld [vmem:[%s2 + $0x8] sm:$0xff]
        %v776 = vld [vmem:[%s2 + $0x10] sm:$0xff]
        %v777 = vld [vmem:[%s2 + $0x18] sm:$0xff]
        %v778 = vld [vmem:[%s2 + $0x20] sm:$0xff]
        %v779 = vld [vmem:[%s2 + $0x28] sm:$0xff]
        %v780 = vld [vmem:[%s2 + $0x30] sm:$0xff]
        %v781 = vld [vmem:[%s2 + $0x38] sm:$0xff]
        %v782 = vld [vmem:[%s2 + $0x40] sm:$0xff]
        %v783 = vld [vmem:[%s2 + $0x48] sm:$0xff]
        %v784 = vld [vmem:[%s2 + $0x50] sm:$0xff]
        %v785 = vld [vmem:[%s2 + $0x58] sm:$0xff]
        %v786 = vld [vmem:[%s2 + $0x60] sm:$0xff]
        %v787 = vld [vmem:[%s2 + $0x68] sm:$0xff]
        %v788 = vld [vmem:[%s2 + $0x70] sm:$0xff]
        %v789 = vld [vmem:[%s2 + $0x78] sm:$0xff]
        %v790 = vlaneseq
        %v791 = vshrl.u32 %v790, 7
        %v792 = vsub.s32 1, %v791
        %v793 = vrot.slane %v336, %v792
        %794 = vmatprep.subr.mxu0 0.0
        %795 = vmatpush1.msra.mxu0 %v774
        %796 = vmatprep.subr.mxu0 0.0
        %797 = vmatpush1.msra.mxu0 %v775
        %798 = vmatprep.subr.mxu0 0.0
        %799 = vmatpush1.msra.mxu0 %v776
        %800 = vmatprep.subr.mxu0 0.0
        %801 = vmatpush1.msra.mxu0 %v777
        %802 = vmatprep.subr.mxu0 0.0
        %803 = vmatpush1.msra.mxu0 %v778
        %804 = vmatprep.subr.mxu0 0.0
        %805 = vmatpush1.msra.mxu0 %v779
        %806 = vmatprep.subr.mxu0 0.0
        %807 = vmatpush1.msra.mxu0 %v780
        %808 = vmatprep.subr.mxu0 0.0
        %809 = vmatpush1.msra.mxu0 %v781
        %810 = vmatprep.subr.mxu0 0.0
        %811 = vmatpush1.msra.mxu0 %v782
        %812 = vmatprep.subr.mxu0 0.0
        %813 = vmatpush1.msra.mxu0 %v783
        %814 = vmatprep.subr.mxu0 0.0
        %815 = vmatpush1.msra.mxu0 %v784
        %816 = vmatprep.subr.mxu0 0.0
        %817 = vmatpush1.msra.mxu0 %v785
        %818 = vmatprep.subr.mxu0 0.0
        %819 = vmatpush1.msra.mxu0 %v786
        %820 = vmatprep.subr.mxu0 0.0
        %821 = vmatpush1.msra.mxu0 %v787
        %822 = vmatprep.subr.mxu0 0.0
        %823 = vmatpush1.msra.mxu0 %v788
        %824 = vmatprep.subr.mxu0 0.0
        %825 = vmatpush1.msra.mxu0 %v789
        %826 = vmatprep.subr.mxu0 0.0
        %827 = vmatpush1.msra.mxu0 0.0
        %828 = vmatprep.subr.mxu0 0.0
        %829 = vmatpush1.msra.mxu0 0.0
        %830 = vmatprep.subr.mxu0 0.0
        %831 = vmatpush1.msra.mxu0 0.0
        %832 = vmatprep.subr.mxu0 0.0
        %833 = vmatpush1.msra.mxu0 0.0
        %834 = vmatprep.subr.mxu0 0.0
        %835 = vmatpush1.msra.mxu0 0.0
        %836 = vmatprep.subr.mxu0 0.0
        %837 = vmatpush1.msra.mxu0 0.0
        %838 = vmatprep.subr.mxu0 0.0
        %839 = vmatpush1.msra.mxu0 0.0
        %840 = vmatprep.subr.mxu0 0.0
        %841 = vmatpush1.msra.mxu0 0.0
        %842 = vmatprep.subr.mxu0 0.0
        %843 = vmatpush1.msra.mxu0 0.0
        %844 = vmatprep.subr.mxu0 0.0
        %845 = vmatpush1.msra.mxu0 0.0
        %846 = vmatprep.subr.mxu0 0.0
        %847 = vmatpush1.msra.mxu0 0.0
        %848 = vmatprep.subr.mxu0 0.0
        %849 = vmatpush1.msra.mxu0 0.0
        %850 = vmatprep.subr.mxu0 0.0
        %851 = vmatpush1.msra.mxu0 0.0
        %852 = vmatprep.subr.mxu0 0.0
        %853 = vmatpush1.msra.mxu0 0.0
        %854 = vmatprep.subr.mxu0 0.0
        %855 = vmatpush1.msra.mxu0 0.0
        %856 = vmatprep.subr.mxu0 0.0
        %857 = vmatpush1.msra.mxu0 0.0
        %858 = vmatprep.mubr.f32.mxu0 0.0
        %859 = vmatmul.mubr.f32.gmra.mrb[0].mxu0 %v773
        %v860 = vpop.f32.mrb[0].mxu0
        %v861 = vadd.f32 %v793, %v860
        %v862 = vpop.f32.mrb[0].mxu0
        %863 = vdwg.mxu0
        %v864 = vrot.slane %v861, 4
        %v865 = vadd.f32 %v861, %v864
        %v866 = vrot.slane %v865, 2
        %v867 = vadd.f32 %v865, %v866
        %v868 = vrot.slane %v867, 1
        %v869 = vadd.f32 %v867, %v868
        %v870 = vmul.f32 %v861, %v861
        %v871 = vrot.slane %v870, 4
        %v872 = vadd.f32 %v870, %v871
        %v873 = vrot.slane %v872, 2
        %v874 = vadd.f32 %v872, %v873
        %v875 = vrot.slane %v874, 1
        %v876 = vadd.f32 %v874, %v875
        %877 = vmatprep.subr.mxu0 0.0
        %878 = vmatpush1.msra.mxu0 %v337
        %879 = vmatprep.subr.mxu0 0.0
        %880 = vmatpush1.msra.mxu0 %v338
        %881 = vmatprep.subr.mxu0 0.0
        %882 = vmatpush1.msra.mxu0 %v339
        %883 = vmatprep.subr.mxu0 0.0
        %884 = vmatpush1.msra.mxu0 %v340
        %885 = vmatprep.subr.mxu0 0.0
        %886 = vmatpush1.msra.mxu0 %v341
        %887 = vmatprep.subr.mxu0 0.0
        %888 = vmatpush1.msra.mxu0 %v342
        %889 = vmatprep.subr.mxu0 0.0
        %890 = vmatpush1.msra.mxu0 %v343
        %891 = vmatprep.subr.mxu0 0.0
        %892 = vmatpush1.msra.mxu0 %v344
        %893 = vmatprep.subr.mxu0 0.0
        %894 = vmatpush1.msra.mxu0 %v345
        %895 = vmatprep.subr.mxu0 0.0
        %896 = vmatpush1.msra.mxu0 %v346
        %897 = vmatprep.subr.mxu0 0.0
        %898 = vmatpush1.msra.mxu0 %v347
        %899 = vmatprep.subr.mxu0 0.0
        %900 = vmatpush1.msra.mxu0 %v348
        %901 = vmatprep.subr.mxu0 0.0
        %902 = vmatpush1.msra.mxu0 %v349
        %903 = vmatprep.subr.mxu0 0.0
        %904 = vmatpush1.msra.mxu0 %v350
        %905 = vmatprep.subr.mxu0 0.0
        %906 = vmatpush1.msra.mxu0 %v351
        %907 = vmatprep.subr.mxu0 0.0
        %908 = vmatpush1.msra.mxu0 %v352
        %909 = vmatprep.subr.mxu0 0.0
        %910 = vmatpush1.msra.mxu0 0.0
        %911 = vmatprep.subr.mxu0 0.0
        %912 = vmatpush1.msra.mxu0 0.0
        %913 = vmatprep.subr.mxu0 0.0
        %914 = vmatpush1.msra.mxu0 0.0
        %915 = vmatprep.subr.mxu0 0.0
        %916 = vmatpush1.msra.mxu0 0.0
        %917 = vmatprep.subr.mxu0 0.0
        %918 = vmatpush1.msra.mxu0 0.0
        %919 = vmatprep.subr.mxu0 0.0
        %920 = vmatpush1.msra.mxu0 0.0
        %921 = vmatprep.subr.mxu0 0.0
        %922 = vmatpush1.msra.mxu0 0.0
        %923 = vmatprep.subr.mxu0 0.0
        %924 = vmatpush1.msra.mxu0 0.0
        %925 = vmatprep.subr.mxu0 0.0
        %926 = vmatpush1.msra.mxu0 0.0
        %927 = vmatprep.subr.mxu0 0.0
        %928 = vmatpush1.msra.mxu0 0.0
        %929 = vmatprep.subr.mxu0 0.0
        %930 = vmatpush1.msra.mxu0 0.0
        %931 = vmatprep.subr.mxu0 0.0
        %932 = vmatpush1.msra.mxu0 0.0
        %933 = vmatprep.subr.mxu0 0.0
        %934 = vmatpush1.msra.mxu0 0.0
        %935 = vmatprep.subr.mxu0 0.0
        %936 = vmatpush1.msra.mxu0 0.0
        %937 = vmatprep.subr.mxu0 0.0
        %938 = vmatpush1.msra.mxu0 0.0
        %939 = vmatprep.subr.mxu0 0.0
        %940 = vmatpush1.msra.mxu0 0.0
        %941 = vmatprep.mubr.f32.mxu0 0.0
        %942 = vmatmul.mubr.f32.gmra.mrb[0].mxu0 %v869
        %v943 = vpop.f32.mrb[0].mxu0
        %v944 = vadd.f32 0.0, %v943
        %v945 = vpop.f32.mrb[0].mxu0
        %946 = vdwg.mxu0
        %947 = vmatprep.subr.mxu0 0.0
        %948 = vmatpush1.msra.mxu0 %v337
        %949 = vmatprep.subr.mxu0 0.0
        %950 = vmatpush1.msra.mxu0 %v338
        %951 = vmatprep.subr.mxu0 0.0
        %952 = vmatpush1.msra.mxu0 %v339
        %953 = vmatprep.subr.mxu0 0.0
        %954 = vmatpush1.msra.mxu0 %v340
        %955 = vmatprep.subr.mxu0 0.0
        %956 = vmatpush1.msra.mxu0 %v341
        %957 = vmatprep.subr.mxu0 0.0
        %958 = vmatpush1.msra.mxu0 %v342
        %959 = vmatprep.subr.mxu0 0.0
        %960 = vmatpush1.msra.mxu0 %v343
        %961 = vmatprep.subr.mxu0 0.0
        %962 = vmatpush1.msra.mxu0 %v344
        %963 = vmatprep.subr.mxu0 0.0
        %964 = vmatpush1.msra.mxu0 %v345
        %965 = vmatprep.subr.mxu0 0.0
        %966 = vmatpush1.msra.mxu0 %v346
        %967 = vmatprep.subr.mxu0 0.0
        %968 = vmatpush1.msra.mxu0 %v347
        %969 = vmatprep.subr.mxu0 0.0
        %970 = vmatpush1.msra.mxu0 %v348
        %971 = vmatprep.subr.mxu0 0.0
        %972 = vmatpush1.msra.mxu0 %v349
        %973 = vmatprep.subr.mxu0 0.0
        %974 = vmatpush1.msra.mxu0 %v350
        %975 = vmatprep.subr.mxu0 0.0
        %976 = vmatpush1.msra.mxu0 %v351
        %977 = vmatprep.subr.mxu0 0.0
        %978 = vmatpush1.msra.mxu0 %v352
        %979 = vmatprep.subr.mxu0 0.0
        %980 = vmatpush1.msra.mxu0 0.0
        %981 = vmatprep.subr.mxu0 0.0
        %982 = vmatpush1.msra.mxu0 0.0
        %983 = vmatprep.subr.mxu0 0.0
        %984 = vmatpush1.msra.mxu0 0.0
        %985 = vmatprep.subr.mxu0 0.0
        %986 = vmatpush1.msra.mxu0 0.0
        %987 = vmatprep.subr.mxu0 0.0
        %988 = vmatpush1.msra.mxu0 0.0
        %989 = vmatprep.subr.mxu0 0.0
        %990 = vmatpush1.msra.mxu0 0.0
        %991 = vmatprep.subr.mxu0 0.0
        %992 = vmatpush1.msra.mxu0 0.0
        %993 = vmatprep.subr.mxu0 0.0
        %994 = vmatpush1.msra.mxu0 0.0
        %995 = vmatprep.subr.mxu0 0.0
        %996 = vmatpush1.msra.mxu0 0.0
        %997 = vmatprep.subr.mxu0 0.0
        %998 = vmatpush1.msra.mxu0 0.0
        %999 = vmatprep.subr.mxu0 0.0
        %1000 = vmatpush1.msra.mxu0 0.0
        %1001 = vmatprep.subr.mxu0 0.0
        %1002 = vmatpush1.msra.mxu0 0.0
        %1003 = vmatprep.subr.mxu0 0.0
        %1004 = vmatpush1.msra.mxu0 0.0
        %1005 = vmatprep.subr.mxu0 0.0
        %1006 = vmatpush1.msra.mxu0 0.0
        %1007 = vmatprep.subr.mxu0 0.0
        %1008 = vmatpush1.msra.mxu0 0.0
        %1009 = vmatprep.subr.mxu0 0.0
        %1010 = vmatpush1.msra.mxu0 0.0
        %1011 = vmatprep.mubr.f32.mxu0 0.0
        %1012 = vmatmul.mubr.f32.gmra.mrb[0].mxu0 %v876
        %v1013 = vpop.f32.mrb[0].mxu0
        %v1014 = vadd.f32 0.0, %v1013
        %v1015 = vpop.f32.mrb[0].mxu0
        %1016 = vdwg.mxu0
        %v1017 = vmul.f32 %v944, %v944
        %v1018 = vsub.f32 %v1014, %v1017
        %v1019 = vadd.f32 %v1018, 1e-05
        %v1020 = vrsqrt.pop %v1019
        %s1021 = scalar_lea.vmem %s6, 4
        %v1022 = vld [vmem:[%s1021] sm:$0xf]
        %v1024 = vsel %vm598, %v1020, 0
        %v1027 = vsel %vm602, %v1022, 0
        %1029 = vmatprep.subr.mxu0 0.0
        %1030 = vmatpush1.msra.mxu0 %v1027
        %1031 = vmatprep.subr.mxu0 0.0
        %1032 = vmatpush1.msra.mxu0 0.0
        %1033 = vmatprep.subr.mxu0 0.0
        %1034 = vmatpush1.msra.mxu0 0.0
        %1035 = vmatprep.subr.mxu0 0.0
        %1036 = vmatpush1.msra.mxu0 0.0
        %1037 = vmatprep.subr.mxu0 0.0
        %1038 = vmatpush1.msra.mxu0 0.0
        %1039 = vmatprep.subr.mxu0 0.0
        %1040 = vmatpush1.msra.mxu0 0.0
        %1041 = vmatprep.subr.mxu0 0.0
        %1042 = vmatpush1.msra.mxu0 0.0
        %1043 = vmatprep.subr.mxu0 0.0
        %1044 = vmatpush1.msra.mxu0 0.0
        %1045 = vmatprep.subr.mxu0 0.0
        %1046 = vmatpush1.msra.mxu0 0.0
        %1047 = vmatprep.subr.mxu0 0.0
        %1048 = vmatpush1.msra.mxu0 0.0
        %1049 = vmatprep.subr.mxu0 0.0
        %1050 = vmatpush1.msra.mxu0 0.0
        %1051 = vmatprep.subr.mxu0 0.0
        %1052 = vmatpush1.msra.mxu0 0.0
        %1053 = vmatprep.subr.mxu0 0.0
        %1054 = vmatpush1.msra.mxu0 0.0
        %1055 = vmatprep.subr.mxu0 0.0
        %1056 = vmatpush1.msra.mxu0 0.0
        %1057 = vmatprep.subr.mxu0 0.0
        %1058 = vmatpush1.msra.mxu0 0.0
        %1059 = vmatprep.subr.mxu0 0.0
        %1060 = vmatpush1.msra.mxu0 0.0
        %1061 = vmatprep.subr.mxu0 0.0
        %1062 = vmatpush1.msra.mxu0 0.0
        %1063 = vmatprep.subr.mxu0 0.0
        %1064 = vmatpush1.msra.mxu0 0.0
        %1065 = vmatprep.subr.mxu0 0.0
        %1066 = vmatpush1.msra.mxu0 0.0
        %1067 = vmatprep.subr.mxu0 0.0
        %1068 = vmatpush1.msra.mxu0 0.0
        %1069 = vmatprep.subr.mxu0 0.0
        %1070 = vmatpush1.msra.mxu0 0.0
        %1071 = vmatprep.subr.mxu0 0.0
        %1072 = vmatpush1.msra.mxu0 0.0
        %1073 = vmatprep.subr.mxu0 0.0
        %1074 = vmatpush1.msra.mxu0 0.0
        %1075 = vmatprep.subr.mxu0 0.0
        %1076 = vmatpush1.msra.mxu0 0.0
        %1077 = vmatprep.subr.mxu0 0.0
        %1078 = vmatpush1.msra.mxu0 0.0
        %1079 = vmatprep.subr.mxu0 0.0
        %1080 = vmatpush1.msra.mxu0 0.0
        %1081 = vmatprep.subr.mxu0 0.0
        %1082 = vmatpush1.msra.mxu0 0.0
        %1083 = vmatprep.subr.mxu0 0.0
        %1084 = vmatpush1.msra.mxu0 0.0
        %1085 = vmatprep.subr.mxu0 0.0
        %1086 = vmatpush1.msra.mxu0 0.0
        %1087 = vmatprep.subr.mxu0 0.0
        %1088 = vmatpush1.msra.mxu0 0.0
        %1089 = vmatprep.subr.mxu0 0.0
        %1090 = vmatpush1.msra.mxu0 0.0
        %1091 = vmatprep.subr.mxu0 0.0
        %1092 = vmatpush1.msra.mxu0 0.0
        %1093 = vmatprep.mubr.f32.mxu0 0.0
        %1094 = vmatmul.mubr.f32.gmra.mrb[0].mxu0 %v1024
        %v1095 = vpop.f32.mrb[0].mxu0
        %v1096 = vadd.f32 0.0, %v1095
        %v1097 = vpop.f32.mrb[0].mxu0
        %1098 = vdwg.mxu0
        %v1099 = vmul.f32 %v944, %v1020
        %v1101 = vsel %vm598, %v1099, 0
        %1103 = vmatprep.subr.mxu0 0.0
        %1104 = vmatpush1.msra.mxu0 %v1027
        %1105 = vmatprep.subr.mxu0 0.0
        %1106 = vmatpush1.msra.mxu0 0.0
        %1107 = vmatprep.subr.mxu0 0.0
        %1108 = vmatpush1.msra.mxu0 0.0
        %1109 = vmatprep.subr.mxu0 0.0
        %1110 = vmatpush1.msra.mxu0 0.0
        %1111 = vmatprep.subr.mxu0 0.0
        %1112 = vmatpush1.msra.mxu0 0.0
        %1113 = vmatprep.subr.mxu0 0.0
        %1114 = vmatpush1.msra.mxu0 0.0
        %1115 = vmatprep.subr.mxu0 0.0
        %1116 = vmatpush1.msra.mxu0 0.0
        %1117 = vmatprep.subr.mxu0 0.0
        %1118 = vmatpush1.msra.mxu0 0.0
        %1119 = vmatprep.subr.mxu0 0.0
        %1120 = vmatpush1.msra.mxu0 0.0
        %1121 = vmatprep.subr.mxu0 0.0
        %1122 = vmatpush1.msra.mxu0 0.0
        %1123 = vmatprep.subr.mxu0 0.0
        %1124 = vmatpush1.msra.mxu0 0.0
        %1125 = vmatprep.subr.mxu0 0.0
        %1126 = vmatpush1.msra.mxu0 0.0
        %1127 = vmatprep.subr.mxu0 0.0
        %1128 = vmatpush1.msra.mxu0 0.0
        %1129 = vmatprep.subr.mxu0 0.0
        %1130 = vmatpush1.msra.mxu0 0.0
        %1131 = vmatprep.subr.mxu0 0.0
        %1132 = vmatpush1.msra.mxu0 0.0
        %1133 = vmatprep.subr.mxu0 0.0
        %1134 = vmatpush1.msra.mxu0 0.0
        %1135 = vmatprep.subr.mxu0 0.0
        %1136 = vmatpush1.msra.mxu0 0.0
        %1137 = vmatprep.subr.mxu0 0.0
        %1138 = vmatpush1.msra.mxu0 0.0
        %1139 = vmatprep.subr.mxu0 0.0
        %1140 = vmatpush1.msra.mxu0 0.0
        %1141 = vmatprep.subr.mxu0 0.0
        %1142 = vmatpush1.msra.mxu0 0.0
        %1143 = vmatprep.subr.mxu0 0.0
        %1144 = vmatpush1.msra.mxu0 0.0
        %1145 = vmatprep.subr.mxu0 0.0
        %1146 = vmatpush1.msra.mxu0 0.0
        %1147 = vmatprep.subr.mxu0 0.0
        %1148 = vmatpush1.msra.mxu0 0.0
        %1149 = vmatprep.subr.mxu0 0.0
        %1150 = vmatpush1.msra.mxu0 0.0
        %1151 = vmatprep.subr.mxu0 0.0
        %1152 = vmatpush1.msra.mxu0 0.0
        %1153 = vmatprep.subr.mxu0 0.0
        %1154 = vmatpush1.msra.mxu0 0.0
        %1155 = vmatprep.subr.mxu0 0.0
        %1156 = vmatpush1.msra.mxu0 0.0
        %1157 = vmatprep.subr.mxu0 0.0
        %1158 = vmatpush1.msra.mxu0 0.0
        %1159 = vmatprep.subr.mxu0 0.0
        %1160 = vmatpush1.msra.mxu0 0.0
        %1161 = vmatprep.subr.mxu0 0.0
        %1162 = vmatpush1.msra.mxu0 0.0
        %1163 = vmatprep.subr.mxu0 0.0
        %1164 = vmatpush1.msra.mxu0 0.0
        %1165 = vmatprep.subr.mxu0 0.0
        %1166 = vmatpush1.msra.mxu0 0.0
        %1167 = vmatprep.mubr.f32.mxu0 0.0
        %1168 = vmatmul.mubr.f32.gmra.mrb[0].mxu0 %v1101
        %v1169 = vpop.f32.mrb[0].mxu0
        %v1170 = vadd.f32 0.0, %v1169
        %v1171 = vpop.f32.mrb[0].mxu0
        %1172 = vdwg.mxu0
        %v1173 = vlaneseq
        %v1174 = vshrl.u32 %v1173, 7
        %v1175 = vsub.s32 0, %v1174
        %v1176 = vrot.slane %v1096, %v1175
        %v1177 = vmul.f32 %v861, %v1176
        %v1178 = vlaneseq
        %v1179 = vshrl.u32 %v1178, 7
        %v1180 = vsub.s32 0, %v1179
        %v1181 = vrot.slane %v1170, %v1180
        %v1182 = vsub.f32 %v1177, %v1181
        %v1183 = vlaneseq
        %v1184 = vshrl.u32 %v1183, 7
        %v1185 = vsub.s32 4, %v1184
        %v1186 = vrot.slane %v336, %v1185
        %v1187 = vadd.f32 %v1182, %v1186
        %v1188 = vmul.f32 %v1187, 0.5
        %v1189 = vmul.f32 %v1187, %v1187
        %v1190 = vmul.f32 %v1189, %v1187
        %v1191 = vmul.f32 %v1190, 0.044715
        %v1192 = vadd.f32 %v1187, %v1191
        %v1193 = vmul.f32 %v1192, 0.7978846
        %v1194 = vtanh.pop %v1193
        %v1195 = vadd.f32 %v1194, 1.0
        %v1196 = vmul.f32 %v1188, %v1195
        %v1197 = vld [vmem:[#allocation7] sm:$0xff]
        %v1198 = vld [vmem:[#allocation7 + $0x8] sm:$0xff]
        %v1199 = vld [vmem:[#allocation7 + $0x10] sm:$0xff]
        %v1200 = vld [vmem:[#allocation7 + $0x18] sm:$0xff]
        %v1201 = vld [vmem:[#allocation7 + $0x20] sm:$0xff]
        %v1202 = vld [vmem:[#allocation7 + $0x28] sm:$0xff]
        %v1203 = vld [vmem:[#allocation7 + $0x30] sm:$0xff]
        %v1204 = vld [vmem:[#allocation7 + $0x38] sm:$0xff]
        %v1205 = vld [vmem:[#allocation7 + $0x40] sm:$0xff]
        %v1206 = vld [vmem:[#allocation7 + $0x48] sm:$0xff]
        %v1207 = vld [vmem:[#allocation7 + $0x50] sm:$0xff]
        %v1208 = vld [vmem:[#allocation7 + $0x58] sm:$0xff]
        %v1209 = vld [vmem:[#allocation7 + $0x60] sm:$0xff]
        %v1210 = vld [vmem:[#allocation7 + $0x68] sm:$0xff]
        %v1211 = vld [vmem:[#allocation7 + $0x70] sm:$0xff]
        %v1212 = vld [vmem:[#allocation7 + $0x78] sm:$0xff]
        %v1213 = vlaneseq
        %v1214 = vshrl.u32 %v1213, 7
        %v1215 = vsub.s32 2, %v1214
        %v1216 = vrot.slane %v336, %v1215
        %1217 = vmatprep.subr.mxu0 0.0
        %1218 = vmatpush1.msra.mxu0 %v1197
        %1219 = vmatprep.subr.mxu0 0.0
        %1220 = vmatpush1.msra.mxu0 %v1198
        %1221 = vmatprep.subr.mxu0 0.0
        %1222 = vmatpush1.msra.mxu0 %v1199
        %1223 = vmatprep.subr.mxu0 0.0
        %1224 = vmatpush1.msra.mxu0 %v1200
        %1225 = vmatprep.subr.mxu0 0.0
        %1226 = vmatpush1.msra.mxu0 %v1201
        %1227 = vmatprep.subr.mxu0 0.0
        %1228 = vmatpush1.msra.mxu0 %v1202
        %1229 = vmatprep.subr.mxu0 0.0
        %1230 = vmatpush1.msra.mxu0 %v1203
        %1231 = vmatprep.subr.mxu0 0.0
        %1232 = vmatpush1.msra.mxu0 %v1204
        %1233 = vmatprep.subr.mxu0 0.0
        %1234 = vmatpush1.msra.mxu0 %v1205
        %1235 = vmatprep.subr.mxu0 0.0
        %1236 = vmatpush1.msra.mxu0 %v1206
        %1237 = vmatprep.subr.mxu0 0.0
        %1238 = vmatpush1.msra.mxu0 %v1207
        %1239 = vmatprep.subr.mxu0 0.0
        %1240 = vmatpush1.msra.mxu0 %v1208
        %1241 = vmatprep.subr.mxu0 0.0
        %1242 = vmatpush1.msra.mxu0 %v1209
        %1243 = vmatprep.subr.mxu0 0.0
        %1244 = vmatpush1.msra.mxu0 %v1210
        %1245 = vmatprep.subr.mxu0 0.0
        %1246 = vmatpush1.msra.mxu0 %v1211
        %1247 = vmatprep.subr.mxu0 0.0
        %1248 = vmatpush1.msra.mxu0 %v1212
        %1249 = vmatprep.subr.mxu0 0.0
        %1250 = vmatpush1.msra.mxu0 0.0
        %1251 = vmatprep.subr.mxu0 0.0
        %1252 = vmatpush1.msra.mxu0 0.0
        %1253 = vmatprep.subr.mxu0 0.0
        %1254 = vmatpush1.msra.mxu0 0.0
        %1255 = vmatprep.subr.mxu0 0.0
        %1256 = vmatpush1.msra.mxu0 0.0
        %1257 = vmatprep.subr.mxu0 0.0
        %1258 = vmatpush1.msra.mxu0 0.0
        %1259 = vmatprep.subr.mxu0 0.0
        %1260 = vmatpush1.msra.mxu0 0.0
        %1261 = vmatprep.subr.mxu0 0.0
        %1262 = vmatpush1.msra.mxu0 0.0
        %1263 = vmatprep.subr.mxu0 0.0
        %1264 = vmatpush1.msra.mxu0 0.0
        %1265 = vmatprep.subr.mxu0 0.0
        %1266 = vmatpush1.msra.mxu0 0.0
        %1267 = vmatprep.subr.mxu0 0.0
        %1268 = vmatpush1.msra.mxu0 0.0
        %1269 = vmatprep.subr.mxu0 0.0
        %1270 = vmatpush1.msra.mxu0 0.0
        %1271 = vmatprep.subr.mxu0 0.0
        %1272 = vmatpush1.msra.mxu0 0.0
        %1273 = vmatprep.subr.mxu0 0.0
        %1274 = vmatpush1.msra.mxu0 0.0
        %1275 = vmatprep.subr.mxu0 0.0
        %1276 = vmatpush1.msra.mxu0 0.0
        %1277 = vmatprep.subr.mxu0 0.0
        %1278 = vmatpush1.msra.mxu0 0.0
        %1279 = vmatprep.subr.mxu0 0.0
        %1280 = vmatpush1.msra.mxu0 0.0
        %1281 = vmatprep.mubr.f32.mxu0 0.0
        %1282 = vmatmul.mubr.f32.gmra.mrb[0].mxu0 %v1196
        %v1283 = vpop.f32.mrb[0].mxu0
        %v1284 = vadd.f32 %v1216, %v1283
        %v1285 = vpop.f32.mrb[0].mxu0
        %1286 = vdwg.mxu0
        %v1287 = vrot.slane %v1284, 4
        %v1288 = vadd.f32 %v1284, %v1287
        %v1289 = vrot.slane %v1288, 2
        %v1290 = vadd.f32 %v1288, %v1289
        %v1291 = vrot.slane %v1290, 1
        %v1292 = vadd.f32 %v1290, %v1291
        %v1293 = vmul.f32 %v1284, %v1284
        %v1294 = vrot.slane %v1293, 4
        %v1295 = vadd.f32 %v1293, %v1294
        %v1296 = vrot.slane %v1295, 2
        %v1297 = vadd.f32 %v1295, %v1296
        %v1298 = vrot.slane %v1297, 1
        %v1299 = vadd.f32 %v1297, %v1298
        %1300 = vmatprep.subr.mxu0 0.0
        %1301 = vmatpush1.msra.mxu0 %v337
        %1302 = vmatprep.subr.mxu0 0.0
        %1303 = vmatpush1.msra.mxu0 %v338
        %1304 = vmatprep.subr.mxu0 0.0
        %1305 = vmatpush1.msra.mxu0 %v339
        %1306 = vmatprep.subr.mxu0 0.0
        %1307 = vmatpush1.msra.mxu0 %v340
        %1308 = vmatprep.subr.mxu0 0.0
        %1309 = vmatpush1.msra.mxu0 %v341
        %1310 = vmatprep.subr.mxu0 0.0
        %1311 = vmatpush1.msra.mxu0 %v342
        %1312 = vmatprep.subr.mxu0 0.0
        %1313 = vmatpush1.msra.mxu0 %v343
        %1314 = vmatprep.subr.mxu0 0.0
        %1315 = vmatpush1.msra.mxu0 %v344
        %1316 = vmatprep.subr.mxu0 0.0
        %1317 = vmatpush1.msra.mxu0 %v345
        %1318 = vmatprep.subr.mxu0 0.0
        %1319 = vmatpush1.msra.mxu0 %v346
        %1320 = vmatprep.subr.mxu0 0.0
        %1321 = vmatpush1.msra.mxu0 %v347
        %1322 = vmatprep.subr.mxu0 0.0
        %1323 = vmatpush1.msra.mxu0 %v348
        %1324 = vmatprep.subr.mxu0 0.0
        %1325 = vmatpush1.msra.mxu0 %v349
        %1326 = vmatprep.subr.mxu0 0.0
        %1327 = vmatpush1.msra.mxu0 %v350
        %1328 = vmatprep.subr.mxu0 0.0
        %1329 = vmatpush1.msra.mxu0 %v351
        %1330 = vmatprep.subr.mxu0 0.0
        %1331 = vmatpush1.msra.mxu0 %v352
        %1332 = vmatprep.subr.mxu0 0.0
        %1333 = vmatpush1.msra.mxu0 0.0
        %1334 = vmatprep.subr.mxu0 0.0
        %1335 = vmatpush1.msra.mxu0 0.0
        %1336 = vmatprep.subr.mxu0 0.0
        %1337 = vmatpush1.msra.mxu0 0.0
        %1338 = vmatprep.subr.mxu0 0.0
        %1339 = vmatpush1.msra.mxu0 0.0
        %1340 = vmatprep.subr.mxu0 0.0
        %1341 = vmatpush1.msra.mxu0 0.0
        %1342 = vmatprep.subr.mxu0 0.0
        %1343 = vmatpush1.msra.mxu0 0.0
        %1344 = vmatprep.subr.mxu0 0.0
        %1345 = vmatpush1.msra.mxu0 0.0
        %1346 = vmatprep.subr.mxu0 0.0
        %1347 = vmatpush1.msra.mxu0 0.0
        %1348 = vmatprep.subr.mxu0 0.0
        %1349 = vmatpush1.msra.mxu0 0.0
        %1350 = vmatprep.subr.mxu0 0.0
        %1351 = vmatpush1.msra.mxu0 0.0
        %1352 = vmatprep.subr.mxu0 0.0
        %1353 = vmatpush1.msra.mxu0 0.0
        %1354 = vmatprep.subr.mxu0 0.0
        %1355 = vmatpush1.msra.mxu0 0.0
        %1356 = vmatprep.subr.mxu0 0.0
        %1357 = vmatpush1.msra.mxu0 0.0
        %1358 = vmatprep.subr.mxu0 0.0
        %1359 = vmatpush1.msra.mxu0 0.0
        %1360 = vmatprep.subr.mxu0 0.0
        %1361 = vmatpush1.msra.mxu0 0.0
        %1362 = vmatprep.subr.mxu0 0.0
        %1363 = vmatpush1.msra.mxu0 0.0
        %1364 = vmatprep.mubr.f32.mxu0 0.0
        %1365 = vmatmul.mubr.f32.gmra.mrb[0].mxu0 %v1292
        %v1366 = vpop.f32.mrb[0].mxu0
        %v1367 = vadd.f32 0.0, %v1366
        %v1368 = vpop.f32.mrb[0].mxu0
        %1369 = vdwg.mxu0
        %1370 = vmatprep.subr.mxu0 0.0
        %1371 = vmatpush1.msra.mxu0 %v337
        %1372 = vmatprep.subr.mxu0 0.0
        %1373 = vmatpush1.msra.mxu0 %v338
        %1374 = vmatprep.subr.mxu0 0.0
        %1375 = vmatpush1.msra.mxu0 %v339
        %1376 = vmatprep.subr.mxu0 0.0
        %1377 = vmatpush1.msra.mxu0 %v340
        %1378 = vmatprep.subr.mxu0 0.0
        %1379 = vmatpush1.msra.mxu0 %v341
        %1380 = vmatprep.subr.mxu0 0.0
        %1381 = vmatpush1.msra.mxu0 %v342
        %1382 = vmatprep.subr.mxu0 0.0
        %1383 = vmatpush1.msra.mxu0 %v343
        %1384 = vmatprep.subr.mxu0 0.0
        %1385 = vmatpush1.msra.mxu0 %v344
        %1386 = vmatprep.subr.mxu0 0.0
        %1387 = vmatpush1.msra.mxu0 %v345
        %1388 = vmatprep.subr.mxu0 0.0
        %1389 = vmatpush1.msra.mxu0 %v346
        %1390 = vmatprep.subr.mxu0 0.0
        %1391 = vmatpush1.msra.mxu0 %v347
        %1392 = vmatprep.subr.mxu0 0.0
        %1393 = vmatpush1.msra.mxu0 %v348
        %1394 = vmatprep.subr.mxu0 0.0
        %1395 = vmatpush1.msra.mxu0 %v349
        %1396 = vmatprep.subr.mxu0 0.0
        %1397 = vmatpush1.msra.mxu0 %v350
        %1398 = vmatprep.subr.mxu0 0.0
        %1399 = vmatpush1.msra.mxu0 %v351
        %1400 = vmatprep.subr.mxu0 0.0
        %1401 = vmatpush1.msra.mxu0 %v352
        %1402 = vmatprep.subr.mxu0 0.0
        %1403 = vmatpush1.msra.mxu0 0.0
        %1404 = vmatprep.subr.mxu0 0.0
        %1405 = vmatpush1.msra.mxu0 0.0
        %1406 = vmatprep.subr.mxu0 0.0
        %1407 = vmatpush1.msra.mxu0 0.0
        %1408 = vmatprep.subr.mxu0 0.0
        %1409 = vmatpush1.msra.mxu0 0.0
        %1410 = vmatprep.subr.mxu0 0.0
        %1411 = vmatpush1.msra.mxu0 0.0
        %1412 = vmatprep.subr.mxu0 0.0
        %1413 = vmatpush1.msra.mxu0 0.0
        %1414 = vmatprep.subr.mxu0 0.0
        %1415 = vmatpush1.msra.mxu0 0.0
        %1416 = vmatprep.subr.mxu0 0.0
        %1417 = vmatpush1.msra.mxu0 0.0
        %1418 = vmatprep.subr.mxu0 0.0
        %1419 = vmatpush1.msra.mxu0 0.0
        %1420 = vmatprep.subr.mxu0 0.0
        %1421 = vmatpush1.msra.mxu0 0.0
        %1422 = vmatprep.subr.mxu0 0.0
        %1423 = vmatpush1.msra.mxu0 0.0
        %1424 = vmatprep.subr.mxu0 0.0
        %1425 = vmatpush1.msra.mxu0 0.0
        %1426 = vmatprep.subr.mxu0 0.0
        %1427 = vmatpush1.msra.mxu0 0.0
        %1428 = vmatprep.subr.mxu0 0.0
        %1429 = vmatpush1.msra.mxu0 0.0
        %1430 = vmatprep.subr.mxu0 0.0
        %1431 = vmatpush1.msra.mxu0 0.0
        %1432 = vmatprep.subr.mxu0 0.0
        %1433 = vmatpush1.msra.mxu0 0.0
        %1434 = vmatprep.mubr.f32.mxu0 0.0
        %1435 = vmatmul.mubr.f32.gmra.mrb[0].mxu0 %v1299
        %v1436 = vpop.f32.mrb[0].mxu0
        %v1437 = vadd.f32 0.0, %v1436
        %v1438 = vpop.f32.mrb[0].mxu0
        %1439 = vdwg.mxu0
        %v1440 = vmul.f32 %v1367, %v1367
        %v1441 = vsub.f32 %v1437, %v1440
        %v1442 = vadd.f32 %v1441, 1e-05
        %v1443 = vrsqrt.pop %v1442
        %s1444 = scalar_lea.vmem %s6, 8
        %v1445 = vld [vmem:[%s1444] sm:$0xf]
        %v1447 = vsel %vm598, %v1443, 0
        %v1450 = vsel %vm602, %v1445, 0
        %1452 = vmatprep.subr.mxu0 0.0
        %1453 = vmatpush1.msra.mxu0 %v1450
        %1454 = vmatprep.subr.mxu0 0.0
        %1455 = vmatpush1.msra.mxu0 0.0
        %1456 = vmatprep.subr.mxu0 0.0
        %1457 = vmatpush1.msra.mxu0 0.0
        %1458 = vmatprep.subr.mxu0 0.0
        %1459 = vmatpush1.msra.mxu0 0.0
        %1460 = vmatprep.subr.mxu0 0.0
        %1461 = vmatpush1.msra.mxu0 0.0
        %1462 = vmatprep.subr.mxu0 0.0
        %1463 = vmatpush1.msra.mxu0 0.0
        %1464 = vmatprep.subr.mxu0 0.0
        %1465 = vmatpush1.msra.mxu0 0.0
        %1466 = vmatprep.subr.mxu0 0.0
        %1467 = vmatpush1.msra.mxu0 0.0
        %1468 = vmatprep.subr.mxu0 0.0
        %1469 = vmatpush1.msra.mxu0 0.0
        %1470 = vmatprep.subr.mxu0 0.0
        %1471 = vmatpush1.msra.mxu0 0.0
        %1472 = vmatprep.subr.mxu0 0.0
        %1473 = vmatpush1.msra.mxu0 0.0
        %1474 = vmatprep.subr.mxu0 0.0
        %1475 = vmatpush1.msra.mxu0 0.0
        %1476 = vmatprep.subr.mxu0 0.0
        %1477 = vmatpush1.msra.mxu0 0.0
        %1478 = vmatprep.subr.mxu0 0.0
        %1479 = vmatpush1.msra.mxu0 0.0
        %1480 = vmatprep.subr.mxu0 0.0
        %1481 = vmatpush1.msra.mxu0 0.0
        %1482 = vmatprep.subr.mxu0 0.0
        %1483 = vmatpush1.msra.mxu0 0.0
        %1484 = vmatprep.subr.mxu0 0.0
        %1485 = vmatpush1.msra.mxu0 0.0
        %1486 = vmatprep.subr.mxu0 0.0
        %1487 = vmatpush1.msra.mxu0 0.0
        %1488 = vmatprep.subr.mxu0 0.0
        %1489 = vmatpush1.msra.mxu0 0.0
        %1490 = vmatprep.subr.mxu0 0.0
        %1491 = vmatpush1.msra.mxu0 0.0
        %1492 = vmatprep.subr.mxu0 0.0
        %1493 = vmatpush1.msra.mxu0 0.0
        %1494 = vmatprep.subr.mxu0 0.0
        %1495 = vmatpush1.msra.mxu0 0.0
        %1496 = vmatprep.subr.mxu0 0.0
        %1497 = vmatpush1.msra.mxu0 0.0
        %1498 = vmatprep.subr.mxu0 0.0
        %1499 = vmatpush1.msra.mxu0 0.0
        %1500 = vmatprep.subr.mxu0 0.0
        %1501 = vmatpush1.msra.mxu0 0.0
        %1502 = vmatprep.subr.mxu0 0.0
        %1503 = vmatpush1.msra.mxu0 0.0
        %1504 = vmatprep.subr.mxu0 0.0
        %1505 = vmatpush1.msra.mxu0 0.0
        %1506 = vmatprep.subr.mxu0 0.0
        %1507 = vmatpush1.msra.mxu0 0.0
        %1508 = vmatprep.subr.mxu0 0.0
        %1509 = vmatpush1.msra.mxu0 0.0
        %1510 = vmatprep.subr.mxu0 0.0
        %1511 = vmatpush1.msra.mxu0 0.0
        %1512 = vmatprep.subr.mxu0 0.0
        %1513 = vmatpush1.msra.mxu0 0.0
        %1514 = vmatprep.subr.mxu0 0.0
        %1515 = vmatpush1.msra.mxu0 0.0
        %1516 = vmatprep.mubr.f32.mxu0 0.0
        %1517 = vmatmul.mubr.f32.gmra.mrb[0].mxu0 %v1447
        %v1518 = vpop.f32.mrb[0].mxu0
        %v1519 = vadd.f32 0.0, %v1518
        %v1520 = vpop.f32.mrb[0].mxu0
        %1521 = vdwg.mxu0
        %v1522 = vmul.f32 %v1367, %v1443
        %v1524 = vsel %vm598, %v1522, 0
        %1526 = vmatprep.subr.mxu0 0.0
        %1527 = vmatpush1.msra.mxu0 %v1450
        %1528 = vmatprep.subr.mxu0 0.0
        %1529 = vmatpush1.msra.mxu0 0.0
        %1530 = vmatprep.subr.mxu0 0.0
        %1531 = vmatpush1.msra.mxu0 0.0
        %1532 = vmatprep.subr.mxu0 0.0
        %1533 = vmatpush1.msra.mxu0 0.0
        %1534 = vmatprep.subr.mxu0 0.0
        %1535 = vmatpush1.msra.mxu0 0.0
        %1536 = vmatprep.subr.mxu0 0.0
        %1537 = vmatpush1.msra.mxu0 0.0
        %1538 = vmatprep.subr.mxu0 0.0
        %1539 = vmatpush1.msra.mxu0 0.0
        %1540 = vmatprep.subr.mxu0 0.0
        %1541 = vmatpush1.msra.mxu0 0.0
        %1542 = vmatprep.subr.mxu0 0.0
        %1543 = vmatpush1.msra.mxu0 0.0
        %1544 = vmatprep.subr.mxu0 0.0
        %1545 = vmatpush1.msra.mxu0 0.0
        %1546 = vmatprep.subr.mxu0 0.0
        %1547 = vmatpush1.msra.mxu0 0.0
        %1548 = vmatprep.subr.mxu0 0.0
        %1549 = vmatpush1.msra.mxu0 0.0
        %1550 = vmatprep.subr.mxu0 0.0
        %1551 = vmatpush1.msra.mxu0 0.0
        %1552 = vmatprep.subr.mxu0 0.0
        %1553 = vmatpush1.msra.mxu0 0.0
        %1554 = vmatprep.subr.mxu0 0.0
        %1555 = vmatpush1.msra.mxu0 0.0
        %1556 = vmatprep.subr.mxu0 0.0
        %1557 = vmatpush1.msra.mxu0 0.0
        %1558 = vmatprep.subr.mxu0 0.0
        %1559 = vmatpush1.msra.mxu0 0.0
        %1560 = vmatprep.subr.mxu0 0.0
        %1561 = vmatpush1.msra.mxu0 0.0
        %1562 = vmatprep.subr.mxu0 0.0
        %1563 = vmatpush1.msra.mxu0 0.0
        %1564 = vmatprep.subr.mxu0 0.0
        %1565 = vmatpush1.msra.mxu0 0.0
        %1566 = vmatprep.subr.mxu0 0.0
        %1567 = vmatpush1.msra.mxu0 0.0
        %1568 = vmatprep.subr.mxu0 0.0
        %1569 = vmatpush1.msra.mxu0 0.0
        %1570 = vmatprep.subr.mxu0 0.0
        %1571 = vmatpush1.msra.mxu0 0.0
        %1572 = vmatprep.subr.mxu0 0.0
        %1573 = vmatpush1.msra.mxu0 0.0
        %1574 = vmatprep.subr.mxu0 0.0
        %1575 = vmatpush1.msra.mxu0 0.0
        %1576 = vmatprep.subr.mxu0 0.0
        %1577 = vmatpush1.msra.mxu0 0.0
        %1578 = vmatprep.subr.mxu0 0.0
        %1579 = vmatpush1.msra.mxu0 0.0
        %1580 = vmatprep.subr.mxu0 0.0
        %1581 = vmatpush1.msra.mxu0 0.0
        %1582 = vmatprep.subr.mxu0 0.0
        %1583 = vmatpush1.msra.mxu0 0.0
        %1584 = vmatprep.subr.mxu0 0.0
        %1585 = vmatpush1.msra.mxu0 0.0
        %1586 = vmatprep.subr.mxu0 0.0
        %1587 = vmatpush1.msra.mxu0 0.0
        %1588 = vmatprep.subr.mxu0 0.0
        %1589 = vmatpush1.msra.mxu0 0.0
        %1590 = vmatprep.mubr.f32.mxu0 0.0
        %1591 = vmatmul.mubr.f32.gmra.mrb[0].mxu0 %v1524
        %v1592 = vpop.f32.mrb[0].mxu0
        %v1593 = vadd.f32 0.0, %v1592
        %v1594 = vpop.f32.mrb[0].mxu0
        %1595 = vdwg.mxu0
        %v1596 = vlaneseq
        %v1597 = vshrl.u32 %v1596, 7
        %v1598 = vsub.s32 0, %v1597
        %v1599 = vrot.slane %v1519, %v1598
        %v1600 = vmul.f32 %v1284, %v1599
        %v1601 = vlaneseq
        %v1602 = vshrl.u32 %v1601, 7
        %v1603 = vsub.s32 0, %v1602
        %v1604 = vrot.slane %v1593, %v1603
        %v1605 = vsub.f32 %v1600, %v1604
        %v1606 = vlaneseq
        %v1607 = vshrl.u32 %v1606, 7
        %v1608 = vsub.s32 5, %v1607
        %v1609 = vrot.slane %v336, %v1608
        %v1610 = vadd.f32 %v1605, %v1609
        %v1611 = vmul.f32 %v1610, 0.5
        %v1612 = vmul.f32 %v1610, %v1610
        %v1613 = vmul.f32 %v1612, %v1610
        %v1614 = vmul.f32 %v1613, 0.044715
        %v1615 = vadd.f32 %v1610, %v1614
        %v1616 = vmul.f32 %v1615, 0.7978846
        %v1617 = vtanh.pop %v1616
        %v1618 = vadd.f32 %v1617, 1.0
        %v1619 = vmul.f32 %v1611, %v1618
        %1620 = vst [vmem:[%s335] sm:$0xff] %v1619
        %s1621 = sand.u32 %s186, 1
        %s1622 = scalar_lea.sflag [#allocation4], %s1621
        %s1623 = sand.u32 %s186, 1
        %s1624 = smul.addr %s1623, 8
        %s1625 = scalar_lea.vmem [#allocation10], %s1624
        // Predicated region
        $region65: #{tpu_custom_call.1} parent=47 // pred_check
          %p1626 = pneg %p196
        $region66: #{tpu_custom_call.1} parent=47 // pred_check_branch
          %1628 = sbr.rel (%p1626) target = $region68
        $region67: #{tpu_custom_call.1} parent=47 // pred_region
          %s1630 = ssub.s32 128, 128
          %1631 = vsyncadd %s1622, %s1630
          %s1632 = smul.addr %s26, 128
          %s1633 = scalar_lea.hbm %s7, %s1632
          %s1635 = sshll.u32 %s1625, 4
          %s1636 = int_to_ptr.vmem [resolvable:$true] %s1635
          %1638 = dma.vmem_to_hbm [thread:$0]  %s1636, 128, %s1633, %s1622
        $region68: #{tpu_custom_call.1} parent=47 // pred_fallthru
          _
      $region48: #{tpu_custom_call.1} parent=5 // pred_fallthru
        _
      %p1639 = scmp.le.s32.totalorder 2, %s21
      // Predicated region
      $region69: #{tpu_custom_call.1} parent=5 // pred_check
        %p1640 = pneg %p1639
      $region70: #{tpu_custom_call.1} parent=5 // pred_check_branch
        %1642 = sbr.rel (%p1640) target = $region72
      $region71: #{tpu_custom_call.1} parent=5 // pred_region
        %s1643 = ssub.s32 %s21, 2
        // Predicated region
        $region73: #{tpu_custom_call.1} parent=71 // pred_check
          %p1644 = pneg %p202
        $region74: #{tpu_custom_call.1} parent=71 // pred_check_branch
          %1646 = sbr.rel (%p1644) target = $region76
        $region75: #{tpu_custom_call.1} parent=71 // pred_region
          %s1647 = sand.u32 %s187, 1
          %s1648 = scalar_lea.sflag [#allocation4], %s1647
          %s1649 = sand.u32 %s187, 1
          %s1650 = smul.addr %s1649, 8
          %s1651 = scalar_lea.vmem [#allocation10], %s1650
          %1652 = dma.done %s1648, 128
        $region76: #{tpu_custom_call.1} parent=71 // pred_fallthru
          _
      $region72: #{tpu_custom_call.1} parent=5 // pred_fallthru
        _
    $region6: #{tpu_custom_call.1} parent=1 // loop_footer
      %s25 = sadd.s32 1, %s21
    $region7: #{tpu_custom_call.1} parent=1 // loop_footer_branch
      %20 = sbr.rel target = $region3
    $region8: #{tpu_custom_call.1} parent=1 // loop_exit
      _
    %1653 = vsyncpa [#allocation3], 1
    %s1654 = scalar_lea.sflag [#allocation3], 1
    %1655 = vsyncpa %s1654, 1
    %1656 = vsyncpa [#allocation6], 1
    %1657 = vsyncpa [#allocation9], 1
    %1658 = vsyncpa [#allocation4], 1
    %s1659 = scalar_lea.sflag [#allocation4], 1
    %1660 = vsyncpa %s1659, 1

</llo_original>
